<compile_context>
chip_gen: v7x
topology: tpu7x:2x2x1
jax: 0.10.0
libtpu: 0.0.40
codegen_flags: <defaults>
</compile_context>

<pallas_src>
import math

import numpy as np
import jax
import jax.numpy as jnp
from jax.experimental import pallas as pl
from jax.experimental.pallas import tpu as pltpu

NUM_HEADS = 4


# ----------------------------------------------------------------------------------------
# Pallas kernel: one batch chunk per grid step (time-major rows).
# ----------------------------------------------------------------------------------------
def _fusion_kernel(bev_ref, front_ref,
                   w_qkv_ref, b_qkv_ref,
                   w_bev_ref,
                   w_front_ref,
                   b_out_ref,
                   out_ref):
    T, bb, F = out_ref.shape
    CHW = bev_ref.shape[-1]
    E = w_bev_ref.shape[0]                # BEV embedding dim (C * P * P)
    hd = E // NUM_HEADS
    bf16 = jnp.bfloat16

    def mm(a, b):
        return jnp.dot(a, b, preferred_element_type=jnp.float32)

    # Fused QKV projection over all T*bb rows (adaptive pool + 1/sqrt(hd) query scale are
    # folded into w_qkv / b_qkv on the host).  Time-major: rows [t*bb, (t+1)*bb) = step t.
    x = jnp.concatenate([bev_ref[t] for t in range(T)], axis=0)        # [T*bb, CHW] bf16
    qkv = mm(x, w_qkv_ref[...]) + b_qkv_ref[...]                       # [T*bb, 3E] f32

    # Per-batch attention over the T time steps.  Row b of every time block belongs to
    # batch element b, so row-wise dot products between time blocks give exactly the
    # per-batch T x T scores -- no block-diagonal mask, no wasted work on masked entries.
    attn_blocks = []
    for tq in range(T):                                                # static unroll (T small)
        head_outs = []
        for h in range(NUM_HEADS):                                     # static unroll (4)
            lo = h * hd
            q = qkv[tq * bb:(tq + 1) * bb, lo:lo + hd]                  # [bb, hd] f32
            scores = [
                jnp.sum(q * qkv[tk * bb:(tk + 1) * bb, E + lo:E + lo + hd],
                        axis=-1, keepdims=True)                        # [bb, 1]
                for tk in range(T)
            ]
            m = scores[0]
            for tk in range(1, T):
                m = jnp.maximum(m, scores[tk])
            ps = [jnp.exp(s - m) for s in scores]                      # every row has tk=tq
            l = ps[0]
            for tk in range(1, T):
                l = l + ps[tk]
            o = None
            for tk in range(T):
                v = qkv[tk * bb:(tk + 1) * bb, 2 * E + lo:2 * E + lo + hd]
                contrib = ps[tk] * v                                   # [bb, hd]
                o = contrib if o is None else o + contrib
            head_outs.append(o * (1.0 / l))                            # normalize after PV
        attn_blocks.append(jnp.concatenate(head_outs, axis=-1))        # [bb, E]

    attn = jnp.concatenate(attn_blocks, axis=0).astype(bf16)           # [T*bb, E]
    # One K=E GEMM: out-proj + per-channel spatial mean + BEV half of fc (folded on host).
    bev_fc = mm(attn, w_bev_ref[...])                                  # [T*bb, F] f32

    # Degenerate front/ego attention, fully folded on the host into one [F, F] weight.
    fe_fc = mm(front_ref[...], w_front_ref[...])                       # [bb, F] f32

    bias = b_out_ref[...]                                              # [1, F]
    for t in range(T):                                                 # lane-dense stores
        out_ref[t] = (bev_fc[t * bb:(t + 1) * bb, :] + fe_fc + bias).astype(out_ref.dtype)


# ----------------------------------------------------------------------------------------
# Host-side glue: parameter init, algebraic weight folding, pallas_call wrapper.
# ----------------------------------------------------------------------------------------
def make_params(key, feature_dim, bev_dim, pooled_dim):
    Eb = bev_dim * pooled_dim * pooled_dim
    F = feature_dim
    ks = jax.random.split(key, 10)
    s = 0.05
    return {
        'bev_in_w':  jax.random.normal(ks[0], (3 * Eb, Eb), jnp.float32) * s,
        'bev_in_b':  jax.random.normal(ks[1], (3 * Eb,),   jnp.float32) * s,
        'bev_out_w': jax.random.normal(ks[2], (Eb, Eb),    jnp.float32) * s,
        'bev_out_b': jax.random.normal(ks[3], (Eb,),       jnp.float32) * s,
        'fe_in_w':   jax.random.normal(ks[4], (3 * F, F),  jnp.float32) * s,
        'fe_in_b':   jax.random.normal(ks[5], (3 * F,),    jnp.float32) * s,
        'fe_out_w':  jax.random.normal(ks[6], (F, F),      jnp.float32) * s,
        'fe_out_b':  jax.random.normal(ks[7], (F,),        jnp.float32) * s,
        'fc_w':      jax.random.normal(ks[8], (F, F + bev_dim), jnp.float32) * s,
        'fc_b':      jax.random.normal(ks[9], (F,),        jnp.float32) * s,
    }


def _adaptive_pool_matrix(in_size, out_size):
    # Row i averages input rows [floor(i*in/out), ceil((i+1)*in/out)) -- AdaptiveAvgPool2d rule.
    m = np.zeros((out_size, in_size), dtype=np.float32)
    for i in range(out_size):
        s = (i * in_size) // out_size
        e = -((-((i + 1) * in_size)) // out_size)
        m[i, s:e] = 1.0 / (e - s)
    return m


def _plan_batch(batch):
    """Return (padded_batch, batch_block).

    Small batches run as one grid step over the full (unpadded) batch.  Larger batches are
    padded to the next multiple of 8 and chunked on 8-aligned blocks <= 256 rows with at
    least 2 grid steps, so the "parallel" grid axis can shard across TensorCores.
    Per-step VMEM is tiny after the T x T attention restructure, so no other cap is needed.
    """
    if batch < 16:
        return batch, batch
    b_pad = -(-batch // 8) * 8
    bb = 8
    for cand in range(8, min(b_pad // 2, 256) + 1, 8):
        if b_pad % cand == 0:
            bb = cand
    return b_pad, bb


def feature_fusion_attention(front, bev, ego, params, pooled_dim):
    """Matches FeatureFusionAttention.forward.  `ego` is accepted for API parity, but the
    forward pass is mathematically independent of it: the front/ego attention's K/V are T
    identical broadcast rows of the front feature, so the softmax output equals the value
    row exactly regardless of the queries."""
    del ego
    B, T, C, H, W = bev.shape
    F = front.shape[-1]
    P = pooled_dim
    E = C * P * P
    assert E % NUM_HEADS == 0 and F % NUM_HEADS == 0
    hd = E // NUM_HEADS

    # ---- host-side algebraic weight folding (exact linear algebra, numpy f64) ----------
    f64 = np.float64
    rr = _adaptive_pool_matrix(H, P).astype(f64)                        # [P, H]
    rc = _adaptive_pool_matrix(W, P).astype(f64)                        # [P, W]
    m_pool = np.einsum('ph,qw->hwpq', rr, rc).reshape(H * W, P * P)     # [H*W, P*P]
    big_pool = np.kron(np.eye(C, dtype=f64), m_pool)                    # [C*H*W, E]
    chan_mean = np.kron(np.eye(C, dtype=f64),
                        np.full((P * P, 1), 1.0 / (P * P), f64))        # [E, C]

    bev_in_w = np.asarray(params['bev_in_w'], f64)
    bev_in_b = np.asarray(params['bev_in_b'], f64)
    bev_out_w = np.asarray(params['bev_out_w'], f64)
    bev_out_b = np.asarray(params['bev_out_b'], f64)
    fe_in_w = np.asarray(params['fe_in_w'], f64)
    fe_in_b = np.asarray(params['fe_in_b'], f64)
    fe_out_w = np.asarray(params['fe_out_w'], f64)
    fe_out_b = np.asarray(params['fe_out_b'], f64)
    fc_w = np.asarray(params['fc_w'], f64)
    fc_b = np.asarray(params['fc_b'], f64)

    scale = 1.0 / math.sqrt(hd)
    col_scale = np.concatenate([np.full(E, scale, f64), np.ones(2 * E, f64)])
    w_qkv = big_pool @ (bev_in_w.T * col_scale)                         # [C*H*W, 3E]
    b_qkv = (bev_in_b * col_scale).reshape(1, 3 * E)

    fc_w1t = fc_w[:, :F].T                                              # [F, F]
    fc_w2t = fc_w[:, F:].T                                              # [C, F]
    mean_fc = chan_mean @ fc_w2t                                        # [E, F]
    w_bev = bev_out_w.T @ mean_fc                                       # [E, F]
    b_bev = bev_out_b @ mean_fc                                         # [F]

    w_fefc = fe_out_w.T @ fc_w1t                                        # [F, F]
    w_front = fe_in_w[2 * F:].T @ w_fefc                                # [F, F] (V-proj folded)
    b_front = fe_in_b[2 * F:] @ w_fefc + fe_out_b @ fc_w1t              # [F]

    b_out = (b_bev + b_front + fc_b).reshape(1, F)

    # ---- activations: time-major BEV rows, padded batch --------------------------------
    b_pad, bb = _plan_batch(B)
    bf16, f32 = jnp.bfloat16, jnp.float32
    bev_t = jnp.transpose(bev.reshape(B, T, C * H * W), (1, 0, 2))      # [T, B, CHW]
    front_p = front
    if b_pad != B:
        bev_t = jnp.pad(bev_t, ((0, 0), (0, b_pad - B), (0, 0)))
        front_p = jnp.pad(front_p, ((0, b_pad - B), (0, 0)))

    args = (
        bev_t.astype(bf16),                               # activations DMA'd as bf16
        front_p.astype(bf16),
        jnp.asarray(w_qkv, bf16), jnp.asarray(b_qkv, f32),
        jnp.asarray(w_bev, bf16),
        jnp.asarray(w_front, bf16),
        jnp.asarray(b_out, f32),
    )

    def whole(shape):
        n = len(shape)
        return pl.BlockSpec(tuple(shape), lambda i, _n=n: (0,) * _n)

    in_specs = [
        pl.BlockSpec((T, bb, C * H * W), lambda i: (0, i, 0)),
        pl.BlockSpec((bb, F), lambda i: (i, 0)),
    ] + [whole(a.shape) for a in args[2:]]

    out_tmf = pl.pallas_call(
        _fusion_kernel,
        out_shape=jax.ShapeDtypeStruct((T, b_pad, F), jnp.float32),
        grid_spec=pltpu.PrefetchScalarGridSpec(
            num_scalar_prefetch=0,
            grid=(b_pad // bb,),
            in_specs=in_specs,
            out_specs=pl.BlockSpec((T, bb, F), lambda i: (0, i, 0)),
        ),
        compiler_params=pltpu.CompilerParams(
            dimension_semantics=("parallel",),   # batch chunks are fully independent
        ),
    )(*args)
    # time-major -> batch-major (wrapper-side layout plumbing), drop batch padding.
    return jnp.transpose(out_tmf, (1, 0, 2))[:B]


# -------------------------- pure-JAX reference (for verification) ------------------------
def _mha_ref(q_in, k_in, v_in, in_w, in_b, out_w, out_b, num_heads):
    E = q_in.shape[-1]
    hd = E // num_heads
    wq, wk, wv = in_w[:E], in_w[E:2 * E], in_w[2 * E:]
    bq, bk, bv = in_b[:E], in_b[E:2 * E], in_b[2 * E:]
    q = q_in @ wq.T + bq
    k = k_in @ wk.T + bk
    v = v_in @ wv.T + bv
    B, T, _ = q.shape
    split = lambda x: x.reshape(B, T, num_heads, hd).transpose(0, 2, 1, 3)
    qh, kh, vh = split(q), split(k), split(v)
    s = jnp.einsum('bhtd,bhsd->bhts', qh, kh) / math.sqrt(hd)
    p = jax.nn.softmax(s, axis=-1)
    o = jnp.einsum('bhts,bhsd->bhtd', p, vh).transpose(0, 2, 1, 3).reshape(B, T, E)
    return o @ out_w.T + out_b


def ref_forward(front, bev, ego, params, pooled_dim):
    B, T, C, H, W = bev.shape
    P = pooled_dim
    F = front.shape[-1]
    pooled = bev.reshape(B * T, C, P, H // P, P, W // P).mean(axis=(3, 5))  # divisible case
    x = pooled.reshape(B, T, C * P * P)
    bev_out = _mha_ref(x, x, x, params['bev_in_w'], params['bev_in_b'],
                       params['bev_out_w'], params['bev_out_b'], NUM_HEADS)
    bev_mean = bev_out.reshape(B, T, C, P * P).mean(axis=-1)
    front_e = jnp.broadcast_to(front[:, None, :], (B, T, F))
    fused_ego = _mha_ref(ego, front_e, front_e, params['fe_in_w'], params['fe_in_b'],
                         params['fe_out_w'], params['fe_out_b'], NUM_HEADS)
    fused = jnp.concatenate([fused_ego, bev_mean], axis=-1)
    return fused @ params['fc_w'].T + params['fc_b']


if __name__ == "__main__":
    # Small shapes consistent with the module: feature_dim=128, bev_dim=8, T=2, spatial=8, pooled=4.
    feature_dim, bev_dim, time_steps, spatial_dim, pooled_dim, batch = 128, 8, 2, 8, 4, 2

    key = jax.random.PRNGKey(0)
    k_in, k_par = jax.random.split(key)
    k1, k2, k3 = jax.random.split(k_in, 3)
    front = jax.random.normal(k1, (batch, feature_dim), jnp.float32)
    bev = jax.random.normal(k2, (batch, time_steps, bev_dim, spatial_dim, spatial_dim), jnp.float32)
    ego = jax.random.normal(k3, (batch, time_steps, feature_dim), jnp.float32)

    params = make_params(k_par, feature_dim, bev_dim, pooled_dim)

    out = feature_fusion_attention(front, bev, ego, params, pooled_dim)
    out = jax.block_until_ready(out)
    assert out.shape == (batch, time_steps, feature_dim)

    with jax.default_matmul_precision("highest"):
        ref = jax.block_until_ready(ref_forward(front, bev, ego, params, pooled_dim))
    np.testing.assert_allclose(np.asarray(out), np.asarray(ref), atol=2e-2, rtol=2e-2)

    print("KERNEL_OK")
</pallas_src>

<mosaic_0001>
module attributes {stable_mosaic.version = 11 : i64} {
  func.func @_fusion_kernel(%arg0: i32, %arg1: memref<2x2x512xbf16, #tpu.memory_space<vmem>>, %arg2: memref<2x128xbf16, #tpu.memory_space<vmem>>, %arg3: memref<512x384xbf16, #tpu.memory_space<vmem>>, %arg4: memref<1x384xf32, #tpu.memory_space<vmem>>, %arg5: memref<128x128xbf16, #tpu.memory_space<vmem>>, %arg6: memref<128x128xbf16, #tpu.memory_space<vmem>>, %arg7: memref<1x128xf32, #tpu.memory_space<vmem>>, %arg8: memref<2x2x128xf32, #tpu.memory_space<vmem>>) attributes {dimension_semantics = [#tpu.dimension_semantics<parallel>], iteration_bounds = array<i64: 1>, scalar_prefetch = 0 : i64, scratch_operands = 0 : i64, tpu.core_type = #tpu.core_type<tc>, window_params = [{transform_indices = @transform_0, window_bounds = array<i64: 2, 2, 512>}, {transform_indices = @transform_1, window_bounds = array<i64: 2, 128>}, {pipeline_mode = #tpu.pipeline_mode<synchronous>, transform_indices = @transform_2, window_bounds = array<i64: 512, 384>}, {pipeline_mode = #tpu.pipeline_mode<synchronous>, transform_indices = @transform_3, window_bounds = array<i64: 1, 384>}, {pipeline_mode = #tpu.pipeline_mode<synchronous>, transform_indices = @transform_4, window_bounds = array<i64: 128, 128>}, {pipeline_mode = #tpu.pipeline_mode<synchronous>, transform_indices = @transform_5, window_bounds = array<i64: 128, 128>}, {pipeline_mode = #tpu.pipeline_mode<synchronous>, transform_indices = @transform_6, window_bounds = array<i64: 1, 128>}, {transform_indices = @transform_7, window_bounds = array<i64: 2, 2, 128>}]} {
    %c0 = arith.constant 0 : index
    %c0_0 = arith.constant 0 : index
    %c0_1 = arith.constant 0 : index
    %0 = vector.load %arg1[%c0, %c0_0, %c0_1] : memref<2x2x512xbf16, #tpu.memory_space<vmem>>, vector<1x2x512xbf16>
    %1 = vector.shape_cast %0 : vector<1x2x512xbf16> to vector<2x512xbf16>
    %c1 = arith.constant 1 : index
    %c0_2 = arith.constant 0 : index
    %c0_3 = arith.constant 0 : index
    %2 = vector.load %arg1[%c1, %c0_2, %c0_3] : memref<2x2x512xbf16, #tpu.memory_space<vmem>>, vector<1x2x512xbf16>
    %3 = vector.shape_cast %2 : vector<1x2x512xbf16> to vector<2x512xbf16>
    %4 = tpu.concatenate %1, %3 in 0 : vector<2x512xbf16>, vector<2x512xbf16> -> vector<4x512xbf16>
    %c0_4 = arith.constant 0 : index
    %c0_5 = arith.constant 0 : index
    %5 = vector.load %arg3[%c0_4, %c0_5] : memref<512x384xbf16, #tpu.memory_space<vmem>>, vector<512x384xbf16>
    %cst = arith.constant dense<0.000000e+00> : vector<4x384xf32>
    %6 = tpu.matmul %4, %5, %cst {dimension_numbers = #tpu.dot_dimension_numbers<[1], [0], [0], [1], [0, 0, 1, 1], [], []>} : vector<4x512xbf16>, vector<512x384xbf16>, vector<4x384xf32> -> vector<4x384xf32>
    %c0_6 = arith.constant 0 : index
    %c0_7 = arith.constant 0 : index
    %7 = vector.load %arg4[%c0_6, %c0_7] : memref<1x384xf32, #tpu.memory_space<vmem>>, vector<1x384xf32>
    %8 = vector.broadcast %7 : vector<1x384xf32> to vector<4x384xf32>
    %9 = arith.addf %6, %8 : vector<4x384xf32>
    %10 = vector.extract_strided_slice %9 {offsets = [0, 0], sizes = [2, 32], strides = [1, 1]} : vector<4x384xf32> to vector<2x32xf32>
    %11 = vector.extract_strided_slice %9 {offsets = [0, 128], sizes = [2, 32], strides = [1, 1]} : vector<4x384xf32> to vector<2x32xf32>
    %12 = arith.mulf %10, %11 : vector<2x32xf32>
    %cst_8 = arith.constant dense<0.000000e+00> : vector<2xf32>
    %13 = vector.multi_reduction <add>, %12, %cst_8 [1] : vector<2x32xf32> to vector<2xf32>
    %14 = vector.shape_cast %13 : vector<2xf32> to vector<2x1xf32>
    %15 = vector.extract_strided_slice %9 {offsets = [2, 128], sizes = [2, 32], strides = [1, 1]} : vector<4x384xf32> to vector<2x32xf32>
    %16 = arith.mulf %10, %15 : vector<2x32xf32>
    %cst_9 = arith.constant dense<0.000000e+00> : vector<2xf32>
    %17 = vector.multi_reduction <add>, %16, %cst_9 [1] : vector<2x32xf32> to vector<2xf32>
    %18 = vector.shape_cast %17 : vector<2xf32> to vector<2x1xf32>
    %19 = arith.maximumf %14, %18 : vector<2x1xf32>
    %20 = arith.subf %14, %19 : vector<2x1xf32>
    %21 = math.exp %20 : vector<2x1xf32>
    %22 = arith.subf %18, %19 : vector<2x1xf32>
    %23 = math.exp %22 : vector<2x1xf32>
    %24 = arith.addf %21, %23 : vector<2x1xf32>
    %25 = vector.extract_strided_slice %9 {offsets = [0, 256], sizes = [2, 32], strides = [1, 1]} : vector<4x384xf32> to vector<2x32xf32>
    %26 = vector.broadcast %21 : vector<2x1xf32> to vector<2x32xf32>
    %27 = arith.mulf %26, %25 : vector<2x32xf32>
    %28 = vector.extract_strided_slice %9 {offsets = [2, 256], sizes = [2, 32], strides = [1, 1]} : vector<4x384xf32> to vector<2x32xf32>
    %29 = vector.broadcast %23 : vector<2x1xf32> to vector<2x32xf32>
    %30 = arith.mulf %29, %28 : vector<2x32xf32>
    %31 = arith.addf %27, %30 : vector<2x32xf32>
    %cst_10 = arith.constant 1.000000e+00 : f32
    %32 = vector.broadcast %cst_10 : f32 to vector<2x1xf32>
    %33 = arith.divf %32, %24 : vector<2x1xf32>
    %34 = vector.broadcast %33 : vector<2x1xf32> to vector<2x32xf32>
    %35 = arith.mulf %31, %34 : vector<2x32xf32>
    %36 = vector.extract_strided_slice %9 {offsets = [0, 32], sizes = [2, 32], strides = [1, 1]} : vector<4x384xf32> to vector<2x32xf32>
    %37 = vector.extract_strided_slice %9 {offsets = [0, 160], sizes = [2, 32], strides = [1, 1]} : vector<4x384xf32> to vector<2x32xf32>
    %38 = arith.mulf %36, %37 : vector<2x32xf32>
    %cst_11 = arith.constant dense<0.000000e+00> : vector<2xf32>
    %39 = vector.multi_reduction <add>, %38, %cst_11 [1] : vector<2x32xf32> to vector<2xf32>
    %40 = vector.shape_cast %39 : vector<2xf32> to vector<2x1xf32>
    %41 = vector.extract_strided_slice %9 {offsets = [2, 160], sizes = [2, 32], strides = [1, 1]} : vector<4x384xf32> to vector<2x32xf32>
    %42 = arith.mulf %36, %41 : vector<2x32xf32>
    %cst_12 = arith.constant dense<0.000000e+00> : vector<2xf32>
    %43 = vector.multi_reduction <add>, %42, %cst_12 [1] : vector<2x32xf32> to vector<2xf32>
    %44 = vector.shape_cast %43 : vector<2xf32> to vector<2x1xf32>
    %45 = arith.maximumf %40, %44 : vector<2x1xf32>
    %46 = arith.subf %40, %45 : vector<2x1xf32>
    %47 = math.exp %46 : vector<2x1xf32>
    %48 = arith.subf %44, %45 : vector<2x1xf32>
    %49 = math.exp %48 : vector<2x1xf32>
    %50 = arith.addf %47, %49 : vector<2x1xf32>
    %51 = vector.extract_strided_slice %9 {offsets = [0, 288], sizes = [2, 32], strides = [1, 1]} : vector<4x384xf32> to vector<2x32xf32>
    %52 = vector.broadcast %47 : vector<2x1xf32> to vector<2x32xf32>
    %53 = arith.mulf %52, %51 : vector<2x32xf32>
    %54 = vector.extract_strided_slice %9 {offsets = [2, 288], sizes = [2, 32], strides = [1, 1]} : vector<4x384xf32> to vector<2x32xf32>
    %55 = vector.broadcast %49 : vector<2x1xf32> to vector<2x32xf32>
    %56 = arith.mulf %55, %54 : vector<2x32xf32>
    %57 = arith.addf %53, %56 : vector<2x32xf32>
    %cst_13 = arith.constant 1.000000e+00 : f32
    %58 = vector.broadcast %cst_13 : f32 to vector<2x1xf32>
    %59 = arith.divf %58, %50 : vector<2x1xf32>
    %60 = vector.broadcast %59 : vector<2x1xf32> to vector<2x32xf32>
    %61 = arith.mulf %57, %60 : vector<2x32xf32>
    %62 = vector.extract_strided_slice %9 {offsets = [0, 64], sizes = [2, 32], strides = [1, 1]} : vector<4x384xf32> to vector<2x32xf32>
    %63 = vector.extract_strided_slice %9 {offsets = [0, 192], sizes = [2, 32], strides = [1, 1]} : vector<4x384xf32> to vector<2x32xf32>
    %64 = arith.mulf %62, %63 : vector<2x32xf32>
    %cst_14 = arith.constant dense<0.000000e+00> : vector<2xf32>
    %65 = vector.multi_reduction <add>, %64, %cst_14 [1] : vector<2x32xf32> to vector<2xf32>
    %66 = vector.shape_cast %65 : vector<2xf32> to vector<2x1xf32>
    %67 = vector.extract_strided_slice %9 {offsets = [2, 192], sizes = [2, 32], strides = [1, 1]} : vector<4x384xf32> to vector<2x32xf32>
    %68 = arith.mulf %62, %67 : vector<2x32xf32>
    %cst_15 = arith.constant dense<0.000000e+00> : vector<2xf32>
    %69 = vector.multi_reduction <add>, %68, %cst_15 [1] : vector<2x32xf32> to vector<2xf32>
    %70 = vector.shape_cast %69 : vector<2xf32> to vector<2x1xf32>
    %71 = arith.maximumf %66, %70 : vector<2x1xf32>
    %72 = arith.subf %66, %71 : vector<2x1xf32>
    %73 = math.exp %72 : vector<2x1xf32>
    %74 = arith.subf %70, %71 : vector<2x1xf32>
    %75 = math.exp %74 : vector<2x1xf32>
    %76 = arith.addf %73, %75 : vector<2x1xf32>
    %77 = vector.extract_strided_slice %9 {offsets = [0, 320], sizes = [2, 32], strides = [1, 1]} : vector<4x384xf32> to vector<2x32xf32>
    %78 = vector.broadcast %73 : vector<2x1xf32> to vector<2x32xf32>
    %79 = arith.mulf %78, %77 : vector<2x32xf32>
    %80 = vector.extract_strided_slice %9 {offsets = [2, 320], sizes = [2, 32], strides = [1, 1]} : vector<4x384xf32> to vector<2x32xf32>
    %81 = vector.broadcast %75 : vector<2x1xf32> to vector<2x32xf32>
    %82 = arith.mulf %81, %80 : vector<2x32xf32>
    %83 = arith.addf %79, %82 : vector<2x32xf32>
    %cst_16 = arith.constant 1.000000e+00 : f32
    %84 = vector.broadcast %cst_16 : f32 to vector<2x1xf32>
    %85 = arith.divf %84, %76 : vector<2x1xf32>
    %86 = vector.broadcast %85 : vector<2x1xf32> to vector<2x32xf32>
    %87 = arith.mulf %83, %86 : vector<2x32xf32>
    %88 = vector.extract_strided_slice %9 {offsets = [0, 96], sizes = [2, 32], strides = [1, 1]} : vector<4x384xf32> to vector<2x32xf32>
    %89 = vector.extract_strided_slice %9 {offsets = [0, 224], sizes = [2, 32], strides = [1, 1]} : vector<4x384xf32> to vector<2x32xf32>
    %90 = arith.mulf %88, %89 : vector<2x32xf32>
    %cst_17 = arith.constant dense<0.000000e+00> : vector<2xf32>
    %91 = vector.multi_reduction <add>, %90, %cst_17 [1] : vector<2x32xf32> to vector<2xf32>
    %92 = vector.shape_cast %91 : vector<2xf32> to vector<2x1xf32>
    %93 = vector.extract_strided_slice %9 {offsets = [2, 224], sizes = [2, 32], strides = [1, 1]} : vector<4x384xf32> to vector<2x32xf32>
    %94 = arith.mulf %88, %93 : vector<2x32xf32>
    %cst_18 = arith.constant dense<0.000000e+00> : vector<2xf32>
    %95 = vector.multi_reduction <add>, %94, %cst_18 [1] : vector<2x32xf32> to vector<2xf32>
    %96 = vector.shape_cast %95 : vector<2xf32> to vector<2x1xf32>
    %97 = arith.maximumf %92, %96 : vector<2x1xf32>
    %98 = arith.subf %92, %97 : vector<2x1xf32>
    %99 = math.exp %98 : vector<2x1xf32>
    %100 = arith.subf %96, %97 : vector<2x1xf32>
    %101 = math.exp %100 : vector<2x1xf32>
    %102 = arith.addf %99, %101 : vector<2x1xf32>
    %103 = vector.extract_strided_slice %9 {offsets = [0, 352], sizes = [2, 32], strides = [1, 1]} : vector<4x384xf32> to vector<2x32xf32>
    %104 = vector.broadcast %99 : vector<2x1xf32> to vector<2x32xf32>
    %105 = arith.mulf %104, %103 : vector<2x32xf32>
    %106 = vector.extract_strided_slice %9 {offsets = [2, 352], sizes = [2, 32], strides = [1, 1]} : vector<4x384xf32> to vector<2x32xf32>
    %107 = vector.broadcast %101 : vector<2x1xf32> to vector<2x32xf32>
    %108 = arith.mulf %107, %106 : vector<2x32xf32>
    %109 = arith.addf %105, %108 : vector<2x32xf32>
    %cst_19 = arith.constant 1.000000e+00 : f32
    %110 = vector.broadcast %cst_19 : f32 to vector<2x1xf32>
    %111 = arith.divf %110, %102 : vector<2x1xf32>
    %112 = vector.broadcast %111 : vector<2x1xf32> to vector<2x32xf32>
    %113 = arith.mulf %109, %112 : vector<2x32xf32>
    %114 = tpu.concatenate %35, %61, %87, %113 in 1 : vector<2x32xf32>, vector<2x32xf32>, vector<2x32xf32>, vector<2x32xf32> -> vector<2x128xf32>
    %115 = vector.extract_strided_slice %9 {offsets = [2, 0], sizes = [2, 32], strides = [1, 1]} : vector<4x384xf32> to vector<2x32xf32>
    %116 = vector.extract_strided_slice %9 {offsets = [0, 128], sizes = [2, 32], strides = [1, 1]} : vector<4x384xf32> to vector<2x32xf32>
    %117 = arith.mulf %115, %116 : vector<2x32xf32>
    %cst_20 = arith.constant dense<0.000000e+00> : vector<2xf32>
    %118 = vector.multi_reduction <add>, %117, %cst_20 [1] : vector<2x32xf32> to vector<2xf32>
    %119 = vector.shape_cast %118 : vector<2xf32> to vector<2x1xf32>
    %120 = vector.extract_strided_slice %9 {offsets = [2, 128], sizes = [2, 32], strides = [1, 1]} : vector<4x384xf32> to vector<2x32xf32>
    %121 = arith.mulf %115, %120 : vector<2x32xf32>
    %cst_21 = arith.constant dense<0.000000e+00> : vector<2xf32>
    %122 = vector.multi_reduction <add>, %121, %cst_21 [1] : vector<2x32xf32> to vector<2xf32>
    %123 = vector.shape_cast %122 : vector<2xf32> to vector<2x1xf32>
    %124 = arith.maximumf %119, %123 : vector<2x1xf32>
    %125 = arith.subf %119, %124 : vector<2x1xf32>
    %126 = math.exp %125 : vector<2x1xf32>
    %127 = arith.subf %123, %124 : vector<2x1xf32>
    %128 = math.exp %127 : vector<2x1xf32>
    %129 = arith.addf %126, %128 : vector<2x1xf32>
    %130 = vector.extract_strided_slice %9 {offsets = [0, 256], sizes = [2, 32], strides = [1, 1]} : vector<4x384xf32> to vector<2x32xf32>
    %131 = vector.broadcast %126 : vector<2x1xf32> to vector<2x32xf32>
    %132 = arith.mulf %131, %130 : vector<2x32xf32>
    %133 = vector.extract_strided_slice %9 {offsets = [2, 256], sizes = [2, 32], strides = [1, 1]} : vector<4x384xf32> to vector<2x32xf32>
    %134 = vector.broadcast %128 : vector<2x1xf32> to vector<2x32xf32>
    %135 = arith.mulf %134, %133 : vector<2x32xf32>
    %136 = arith.addf %132, %135 : vector<2x32xf32>
    %cst_22 = arith.constant 1.000000e+00 : f32
    %137 = vector.broadcast %cst_22 : f32 to vector<2x1xf32>
    %138 = arith.divf %137, %129 : vector<2x1xf32>
    %139 = vector.broadcast %138 : vector<2x1xf32> to vector<2x32xf32>
    %140 = arith.mulf %136, %139 : vector<2x32xf32>
    %141 = vector.extract_strided_slice %9 {offsets = [2, 32], sizes = [2, 32], strides = [1, 1]} : vector<4x384xf32> to vector<2x32xf32>
    %142 = vector.extract_strided_slice %9 {offsets = [0, 160], sizes = [2, 32], strides = [1, 1]} : vector<4x384xf32> to vector<2x32xf32>
    %143 = arith.mulf %141, %142 : vector<2x32xf32>
    %cst_23 = arith.constant dense<0.000000e+00> : vector<2xf32>
    %144 = vector.multi_reduction <add>, %143, %cst_23 [1] : vector<2x32xf32> to vector<2xf32>
    %145 = vector.shape_cast %144 : vector<2xf32> to vector<2x1xf32>
    %146 = vector.extract_strided_slice %9 {offsets = [2, 160], sizes = [2, 32], strides = [1, 1]} : vector<4x384xf32> to vector<2x32xf32>
    %147 = arith.mulf %141, %146 : vector<2x32xf32>
    %cst_24 = arith.constant dense<0.000000e+00> : vector<2xf32>
    %148 = vector.multi_reduction <add>, %147, %cst_24 [1] : vector<2x32xf32> to vector<2xf32>
    %149 = vector.shape_cast %148 : vector<2xf32> to vector<2x1xf32>
    %150 = arith.maximumf %145, %149 : vector<2x1xf32>
    %151 = arith.subf %145, %150 : vector<2x1xf32>
    %152 = math.exp %151 : vector<2x1xf32>
    %153 = arith.subf %149, %150 : vector<2x1xf32>
    %154 = math.exp %153 : vector<2x1xf32>
    %155 = arith.addf %152, %154 : vector<2x1xf32>
    %156 = vector.extract_strided_slice %9 {offsets = [0, 288], sizes = [2, 32], strides = [1, 1]} : vector<4x384xf32> to vector<2x32xf32>
    %157 = vector.broadcast %152 : vector<2x1xf32> to vector<2x32xf32>
    %158 = arith.mulf %157, %156 : vector<2x32xf32>
    %159 = vector.extract_strided_slice %9 {offsets = [2, 288], sizes = [2, 32], strides = [1, 1]} : vector<4x384xf32> to vector<2x32xf32>
    %160 = vector.broadcast %154 : vector<2x1xf32> to vector<2x32xf32>
    %161 = arith.mulf %160, %159 : vector<2x32xf32>
    %162 = arith.addf %158, %161 : vector<2x32xf32>
    %cst_25 = arith.constant 1.000000e+00 : f32
    %163 = vector.broadcast %cst_25 : f32 to vector<2x1xf32>
    %164 = arith.divf %163, %155 : vector<2x1xf32>
    %165 = vector.broadcast %164 : vector<2x1xf32> to vector<2x32xf32>
    %166 = arith.mulf %162, %165 : vector<2x32xf32>
    %167 = vector.extract_strided_slice %9 {offsets = [2, 64], sizes = [2, 32], strides = [1, 1]} : vector<4x384xf32> to vector<2x32xf32>
    %168 = vector.extract_strided_slice %9 {offsets = [0, 192], sizes = [2, 32], strides = [1, 1]} : vector<4x384xf32> to vector<2x32xf32>
    %169 = arith.mulf %167, %168 : vector<2x32xf32>
    %cst_26 = arith.constant dense<0.000000e+00> : vector<2xf32>
    %170 = vector.multi_reduction <add>, %169, %cst_26 [1] : vector<2x32xf32> to vector<2xf32>
    %171 = vector.shape_cast %170 : vector<2xf32> to vector<2x1xf32>
    %172 = vector.extract_strided_slice %9 {offsets = [2, 192], sizes = [2, 32], strides = [1, 1]} : vector<4x384xf32> to vector<2x32xf32>
    %173 = arith.mulf %167, %172 : vector<2x32xf32>
    %cst_27 = arith.constant dense<0.000000e+00> : vector<2xf32>
    %174 = vector.multi_reduction <add>, %173, %cst_27 [1] : vector<2x32xf32> to vector<2xf32>
    %175 = vector.shape_cast %174 : vector<2xf32> to vector<2x1xf32>
    %176 = arith.maximumf %171, %175 : vector<2x1xf32>
    %177 = arith.subf %171, %176 : vector<2x1xf32>
    %178 = math.exp %177 : vector<2x1xf32>
    %179 = arith.subf %175, %176 : vector<2x1xf32>
    %180 = math.exp %179 : vector<2x1xf32>
    %181 = arith.addf %178, %180 : vector<2x1xf32>
    %182 = vector.extract_strided_slice %9 {offsets = [0, 320], sizes = [2, 32], strides = [1, 1]} : vector<4x384xf32> to vector<2x32xf32>
    %183 = vector.broadcast %178 : vector<2x1xf32> to vector<2x32xf32>
    %184 = arith.mulf %183, %182 : vector<2x32xf32>
    %185 = vector.extract_strided_slice %9 {offsets = [2, 320], sizes = [2, 32], strides = [1, 1]} : vector<4x384xf32> to vector<2x32xf32>
    %186 = vector.broadcast %180 : vector<2x1xf32> to vector<2x32xf32>
    %187 = arith.mulf %186, %185 : vector<2x32xf32>
    %188 = arith.addf %184, %187 : vector<2x32xf32>
    %cst_28 = arith.constant 1.000000e+00 : f32
    %189 = vector.broadcast %cst_28 : f32 to vector<2x1xf32>
    %190 = arith.divf %189, %181 : vector<2x1xf32>
    %191 = vector.broadcast %190 : vector<2x1xf32> to vector<2x32xf32>
    %192 = arith.mulf %188, %191 : vector<2x32xf32>
    %193 = vector.extract_strided_slice %9 {offsets = [2, 96], sizes = [2, 32], strides = [1, 1]} : vector<4x384xf32> to vector<2x32xf32>
    %194 = vector.extract_strided_slice %9 {offsets = [0, 224], sizes = [2, 32], strides = [1, 1]} : vector<4x384xf32> to vector<2x32xf32>
    %195 = arith.mulf %193, %194 : vector<2x32xf32>
    %cst_29 = arith.constant dense<0.000000e+00> : vector<2xf32>
    %196 = vector.multi_reduction <add>, %195, %cst_29 [1] : vector<2x32xf32> to vector<2xf32>
    %197 = vector.shape_cast %196 : vector<2xf32> to vector<2x1xf32>
    %198 = vector.extract_strided_slice %9 {offsets = [2, 224], sizes = [2, 32], strides = [1, 1]} : vector<4x384xf32> to vector<2x32xf32>
    %199 = arith.mulf %193, %198 : vector<2x32xf32>
    %cst_30 = arith.constant dense<0.000000e+00> : vector<2xf32>
    %200 = vector.multi_reduction <add>, %199, %cst_30 [1] : vector<2x32xf32> to vector<2xf32>
    %201 = vector.shape_cast %200 : vector<2xf32> to vector<2x1xf32>
    %202 = arith.maximumf %197, %201 : vector<2x1xf32>
    %203 = arith.subf %197, %202 : vector<2x1xf32>
    %204 = math.exp %203 : vector<2x1xf32>
    %205 = arith.subf %201, %202 : vector<2x1xf32>
    %206 = math.exp %205 : vector<2x1xf32>
    %207 = arith.addf %204, %206 : vector<2x1xf32>
    %208 = vector.extract_strided_slice %9 {offsets = [0, 352], sizes = [2, 32], strides = [1, 1]} : vector<4x384xf32> to vector<2x32xf32>
    %209 = vector.broadcast %204 : vector<2x1xf32> to vector<2x32xf32>
    %210 = arith.mulf %209, %208 : vector<2x32xf32>
    %211 = vector.extract_strided_slice %9 {offsets = [2, 352], sizes = [2, 32], strides = [1, 1]} : vector<4x384xf32> to vector<2x32xf32>
    %212 = vector.broadcast %206 : vector<2x1xf32> to vector<2x32xf32>
    %213 = arith.mulf %212, %211 : vector<2x32xf32>
    %214 = arith.addf %210, %213 : vector<2x32xf32>
    %cst_31 = arith.constant 1.000000e+00 : f32
    %215 = vector.broadcast %cst_31 : f32 to vector<2x1xf32>
    %216 = arith.divf %215, %207 : vector<2x1xf32>
    %217 = vector.broadcast %216 : vector<2x1xf32> to vector<2x32xf32>
    %218 = arith.mulf %214, %217 : vector<2x32xf32>
    %219 = tpu.concatenate %140, %166, %192, %218 in 1 : vector<2x32xf32>, vector<2x32xf32>, vector<2x32xf32>, vector<2x32xf32> -> vector<2x128xf32>
    %220 = tpu.concatenate %114, %219 in 0 : vector<2x128xf32>, vector<2x128xf32> -> vector<4x128xf32>
    %221 = arith.truncf %220 : vector<4x128xf32> to vector<4x128xbf16>
    %c0_32 = arith.constant 0 : index
    %c0_33 = arith.constant 0 : index
    %222 = vector.load %arg5[%c0_32, %c0_33] : memref<128x128xbf16, #tpu.memory_space<vmem>>, vector<128x128xbf16>
    %cst_34 = arith.constant dense<0.000000e+00> : vector<4x128xf32>
    %223 = tpu.matmul %221, %222, %cst_34 {dimension_numbers = #tpu.dot_dimension_numbers<[1], [0], [0], [1], [0, 0, 1, 1], [], []>} : vector<4x128xbf16>, vector<128x128xbf16>, vector<4x128xf32> -> vector<4x128xf32>
    %c0_35 = arith.constant 0 : index
    %c0_36 = arith.constant 0 : index
    %224 = vector.load %arg2[%c0_35, %c0_36] : memref<2x128xbf16, #tpu.memory_space<vmem>>, vector<2x128xbf16>
    %c0_37 = arith.constant 0 : index
    %c0_38 = arith.constant 0 : index
    %225 = vector.load %arg6[%c0_37, %c0_38] : memref<128x128xbf16, #tpu.memory_space<vmem>>, vector<128x128xbf16>
    %cst_39 = arith.constant dense<0.000000e+00> : vector<2x128xf32>
    %226 = tpu.matmul %224, %225, %cst_39 {dimension_numbers = #tpu.dot_dimension_numbers<[1], [0], [0], [1], [0, 0, 1, 1], [], []>} : vector<2x128xbf16>, vector<128x128xbf16>, vector<2x128xf32> -> vector<2x128xf32>
    %c0_40 = arith.constant 0 : index
    %c0_41 = arith.constant 0 : index
    %227 = vector.load %arg7[%c0_40, %c0_41] : memref<1x128xf32, #tpu.memory_space<vmem>>, vector<1x128xf32>
    %228 = vector.extract_strided_slice %223 {offsets = [0, 0], sizes = [2, 128], strides = [1, 1]} : vector<4x128xf32> to vector<2x128xf32>
    %229 = arith.addf %228, %226 : vector<2x128xf32>
    %230 = vector.broadcast %227 : vector<1x128xf32> to vector<2x128xf32>
    %231 = arith.addf %229, %230 : vector<2x128xf32>
    %c0_42 = arith.constant 0 : index
    %c0_43 = arith.constant 0 : index
    %c0_44 = arith.constant 0 : index
    %232 = vector.load %arg8[%c0_42, %c0_43, %c0_44] : memref<2x2x128xf32, #tpu.memory_space<vmem>>, vector<1x2x128xf32>
    %233 = vector.shape_cast %232 : vector<1x2x128xf32> to vector<2x128xf32>
    %234 = vector.shape_cast %231 : vector<2x128xf32> to vector<1x2x128xf32>
    tpu.vector_store %arg8[%c0_42, %c0_43, %c0_44], %234 {strides = array<i32>} : memref<2x2x128xf32, #tpu.memory_space<vmem>>, vector<1x2x128xf32>,
    %235 = vector.extract_strided_slice %223 {offsets = [2, 0], sizes = [2, 128], strides = [1, 1]} : vector<4x128xf32> to vector<2x128xf32>
    %236 = arith.addf %235, %226 : vector<2x128xf32>
    %237 = vector.broadcast %227 : vector<1x128xf32> to vector<2x128xf32>
    %238 = arith.addf %236, %237 : vector<2x128xf32>
    %c1_45 = arith.constant 1 : index
    %c0_46 = arith.constant 0 : index
    %c0_47 = arith.constant 0 : index
    %239 = vector.load %arg8[%c1_45, %c0_46, %c0_47] : memref<2x2x128xf32, #tpu.memory_space<vmem>>, vector<1x2x128xf32>
    %240 = vector.shape_cast %239 : vector<1x2x128xf32> to vector<2x128xf32>
    %241 = vector.shape_cast %238 : vector<2x128xf32> to vector<1x2x128xf32>
    tpu.vector_store %arg8[%c1_45, %c0_46, %c0_47], %241 {strides = array<i32>} : memref<2x2x128xf32, #tpu.memory_space<vmem>>, vector<1x2x128xf32>,
    return
  }
  func.func @transform_0(%arg0: i32) -> (i32, i32, i32) {
    %c0_i32 = arith.constant 0 : i32
    %c0_i32_0 = arith.constant 0 : i32
    %c0_i32_1 = arith.constant 0 : i32
    return %c0_i32, %arg0, %c0_i32_0 : i32, i32, i32
  }
  func.func @transform_1(%arg0: i32) -> (i32, i32) {
    %c0_i32 = arith.constant 0 : i32
    %c0_i32_0 = arith.constant 0 : i32
    return %arg0, %c0_i32 : i32, i32
  }
  func.func @transform_2(%arg0: i32) -> (i32, i32) {
    %c0_i32 = arith.constant 0 : i32
    %c0_i32_0 = arith.constant 0 : i32
    %c0_i32_1 = arith.constant 0 : i32
    return %c0_i32, %c0_i32_0 : i32, i32
  }
  func.func @transform_3(%arg0: i32) -> (i32, i32) {
    %c0_i32 = arith.constant 0 : i32
    %c0_i32_0 = arith.constant 0 : i32
    %c0_i32_1 = arith.constant 0 : i32
    return %c0_i32, %c0_i32_0 : i32, i32
  }
  func.func @transform_4(%arg0: i32) -> (i32, i32) {
    %c0_i32 = arith.constant 0 : i32
    %c0_i32_0 = arith.constant 0 : i32
    %c0_i32_1 = arith.constant 0 : i32
    return %c0_i32, %c0_i32_0 : i32, i32
  }
  func.func @transform_5(%arg0: i32) -> (i32, i32) {
    %c0_i32 = arith.constant 0 : i32
    %c0_i32_0 = arith.constant 0 : i32
    %c0_i32_1 = arith.constant 0 : i32
    return %c0_i32, %c0_i32_0 : i32, i32
  }
  func.func @transform_6(%arg0: i32) -> (i32, i32) {
    %c0_i32 = arith.constant 0 : i32
    %c0_i32_0 = arith.constant 0 : i32
    %c0_i32_1 = arith.constant 0 : i32
    return %c0_i32, %c0_i32_0 : i32, i32
  }
  func.func @transform_7(%arg0: i32) -> (i32, i32, i32) {
    %c0_i32 = arith.constant 0 : i32
    %c0_i32_0 = arith.constant 0 : i32
    %c0_i32_1 = arith.constant 0 : i32
    return %c0_i32, %arg0, %c0_i32_0 : i32, i32, i32
  }
}

</mosaic_0001>

<llo_original>
// kernel: tpu_custom_call.1
$region0: #{tpu_custom_call.1}
  #allocation0 [shape = 'u32[]', space=smem, size = 0x4, offset = 0x4, fixed_abs, tag = 'smem constant byte address 0x4 - core index']
  #allocation1 [shape = 'u32[144,128]{1,0:T(1,128)}', space=vmem, size = 0x12000, scoped, tag = 'internal scratch']
  %s0 = inlined_call_operand.hbm [shape: bf16[2,2,512], index: 0, kind: input, shape index: {}]
  %s1 = inlined_call_operand.vmem [shape: bf16[2,128], index: 1, kind: input, shape index: {}]
  %s2 = inlined_call_operand.hbm [shape: bf16[512,384], index: 2, kind: input, shape index: {}]
  %s3 = inlined_call_operand.vmem [shape: f32[1,384], index: 3, kind: input, shape index: {}]
  %s4 = inlined_call_operand.hbm [shape: bf16[128,128], index: 4, kind: input, shape index: {}]
  %s5 = inlined_call_operand.hbm [shape: bf16[128,128], index: 5, kind: input, shape index: {}]
  %s6 = inlined_call_operand.vmem [shape: f32[1,128], index: 6, kind: input, shape index: {}]
  %s7 = inlined_call_operand.hbm [shape: f32[2,2,128], index: 7, kind: output, shape index: {}]
  %s8 = sld [smem:[#allocation0]]
  $region54: #{tpu_custom_call.1} parent=0
    _
  %s10 = ssub.s32 1, %s8
  %s11 = scalar_select 0, %s10, %s8
  $region1: #{tpu_custom_call.1} parent=0
    #allocation2 [shape = 'u8[4096]{0}', space=vmem, size = 0x1000, scoped, tag = 'input window, operand 0, single buffered']
    #allocation3 [shape = 's32[1]{0}', space=sflag, size = 0x4, scoped, tag = 'scoped memory for tpu_custom_call.1']
    #allocation4 [shape = 's32[1]{0}', space=sflag, size = 0x4, scoped, tag = 'scoped memory for tpu_custom_call.1']
    #allocation5 [shape = 'u8[393216]{0}', space=vmem, size = 0x60000, scoped, tag = 'input window, operand 2, single buffered']
    #allocation6 [shape = 's32[1]{0}', space=sflag, size = 0x4, scoped, tag = 'scoped memory for tpu_custom_call.1']
    #allocation7 [shape = 'u8[32768]{0}', space=vmem, size = 0x8000, scoped, tag = 'input window, operand 4, single buffered']
    #allocation8 [shape = 'u8[32768]{0}', space=vmem, size = 0x8000, scoped, tag = 'input window, operand 5, single buffered']
    #allocation9 [shape = 's32[1]{0}', space=sflag, size = 0x4, scoped, tag = 'scoped memory for tpu_custom_call.1']
    #allocation10 [shape = 'u8[2048]{0}', space=vmem, size = 0x800, scoped, tag = 'output window, operand 0, single buffered']
    %12 = vsyncpa [#allocation3], 0
    %13 = vsyncpa [#allocation6], 0
    %14 = vsyncpa [#allocation9], 0
    %15 = vsyncpa [#allocation4], 0
    // Predicated region
    $region2: #{tpu_custom_call.1} parent=1 // pred_check
      _
    $region3: #{tpu_custom_call.1} parent=1 // pred_check_branch
      %17 = sbr.rel (0) target = $region5
    $region4: #{tpu_custom_call.1} parent=1 // pred_region
      %s19 = ssub.s32 128, 128
      %20 = vsyncadd [#allocation3], %s19
      %s21 = sshll.u32 [#allocation2], 4
      %s22 = int_to_ptr.vmem [resolvable:$true] %s21
      %27 = dma.hbm_to_vmem [thread:$0]  %s0, 128, %s22, [#allocation3], 64, 64, 4
    $region5: #{tpu_custom_call.1} parent=1 // pred_fallthru
      _
    // Predicated region
    $region6: #{tpu_custom_call.1} parent=1 // pred_check
      _
    $region7: #{tpu_custom_call.1} parent=1 // pred_check_branch
      %29 = sbr.rel (0) target = $region9
    $region8: #{tpu_custom_call.1} parent=1 // pred_region
      _
    $region9: #{tpu_custom_call.1} parent=1 // pred_fallthru
      _
    // Predicated region
    $region10: #{tpu_custom_call.1} parent=1 // pred_check
      _
    $region11: #{tpu_custom_call.1} parent=1 // pred_check_branch
      %31 = sbr.rel (0) target = $region13
    $region12: #{tpu_custom_call.1} parent=1 // pred_region
      %s33 = ssub.s32 12288, 12288
      %34 = vsyncadd [#allocation6], %s33
      %s35 = sshll.u32 [#allocation5], 4
      %s36 = int_to_ptr.vmem [resolvable:$true] %s35
      %41 = dma.hbm_to_vmem [thread:$0]  %s2, 12288, %s36, [#allocation6], 192, 192, 12
    $region13: #{tpu_custom_call.1} parent=1 // pred_fallthru
      _
    // Predicated region
    $region14: #{tpu_custom_call.1} parent=1 // pred_check
      _
    $region15: #{tpu_custom_call.1} parent=1 // pred_check_branch
      %43 = sbr.rel (0) target = $region17
    $region16: #{tpu_custom_call.1} parent=1 // pred_region
      _
    $region17: #{tpu_custom_call.1} parent=1 // pred_fallthru
      _
    // Predicated region
    $region18: #{tpu_custom_call.1} parent=1 // pred_check
      _
    $region19: #{tpu_custom_call.1} parent=1 // pred_check_branch
      %45 = sbr.rel (0) target = $region21
    $region20: #{tpu_custom_call.1} parent=1 // pred_region
      %s47 = ssub.s32 1024, 1024
      %48 = vsyncadd [#allocation6], %s47
      %s49 = sshll.u32 [#allocation7], 4
      %s50 = int_to_ptr.vmem [resolvable:$true] %s49
      %55 = dma.hbm_to_vmem [thread:$0]  %s4, 1024, %s50, [#allocation6], 64, 64, 4
    $region21: #{tpu_custom_call.1} parent=1 // pred_fallthru
      _
    // Predicated region
    $region22: #{tpu_custom_call.1} parent=1 // pred_check
      _
    $region23: #{tpu_custom_call.1} parent=1 // pred_check_branch
      %57 = sbr.rel (0) target = $region25
    $region24: #{tpu_custom_call.1} parent=1 // pred_region
      %s59 = ssub.s32 1024, 1024
      %60 = vsyncadd [#allocation9], %s59
      %s61 = sshll.u32 [#allocation8], 4
      %s62 = int_to_ptr.vmem [resolvable:$true] %s61
      %67 = dma.hbm_to_vmem [thread:$0]  %s5, 1024, %s62, [#allocation9], 64, 64, 4
    $region25: #{tpu_custom_call.1} parent=1 // pred_fallthru
      _
    // Predicated region
    $region26: #{tpu_custom_call.1} parent=1 // pred_check
      _
    $region27: #{tpu_custom_call.1} parent=1 // pred_check_branch
      %69 = sbr.rel (0) target = $region29
    $region28: #{tpu_custom_call.1} parent=1 // pred_region
      _
    $region29: #{tpu_custom_call.1} parent=1 // pred_fallthru
      _
    // Predicated region
    $region30: #{tpu_custom_call.1} parent=1 // pred_check
      _
    $region31: #{tpu_custom_call.1} parent=1 // pred_check_branch
      %71 = sbr.rel (0) target = $region33
    $region32: #{tpu_custom_call.1} parent=1 // pred_region
      %72 = dma.done [#allocation3], 128
    $region33: #{tpu_custom_call.1} parent=1 // pred_fallthru
      _
    // Predicated region
    $region34: #{tpu_custom_call.1} parent=1 // pred_check
      _
    $region35: #{tpu_custom_call.1} parent=1 // pred_check_branch
      %74 = sbr.rel (0) target = $region37
    $region36: #{tpu_custom_call.1} parent=1 // pred_region
      %75 = dma.done [#allocation6], 12288
    $region37: #{tpu_custom_call.1} parent=1 // pred_fallthru
      _
    // Predicated region
    $region38: #{tpu_custom_call.1} parent=1 // pred_check
      _
    $region39: #{tpu_custom_call.1} parent=1 // pred_check_branch
      %77 = sbr.rel (0) target = $region41
    $region40: #{tpu_custom_call.1} parent=1 // pred_region
      %78 = dma.done [#allocation6], 1024
    $region41: #{tpu_custom_call.1} parent=1 // pred_fallthru
      _
    // Predicated region
    $region42: #{tpu_custom_call.1} parent=1 // pred_check
      _
    $region43: #{tpu_custom_call.1} parent=1 // pred_check_branch
      %80 = sbr.rel (0) target = $region45
    $region44: #{tpu_custom_call.1} parent=1 // pred_region
      %81 = dma.done [#allocation9], 1024
    $region45: #{tpu_custom_call.1} parent=1 // pred_fallthru
      _
    %v83 = vld [vmem:[#allocation2] sm:$0xf]
    %s84 = scalar_lea.vmem [#allocation2], 4
    %v85 = vld [vmem:[%s84] sm:$0xf]
    %v88 = vunpack.c.l.s4 1966171168
    %v89 = vunpack.c.0.s8 %v88
    %v90 = vlaneseq
    %v91 = vshrl.u32 %v90, 7
    %v92 = vsub.s32 %v89, %v91
    %v93 = vrot.slane %v83, %v92
    %v94 = vcombine.high %v93, %v93
    %v96 = vunpack.c.l.s4 1966171168
    %v97 = vunpack.c.0.s8 %v96
    %v98 = vlaneseq
    %v99 = vshrl.u32 %v98, 7
    %v100 = vsub.s32 %v97, %v99
    %v101 = vrot.slane %v93, %v100
    %v103 = vunpack.c.l.s4 1966171168
    %v104 = vunpack.c.0.s8 %v103
    %v105 = vlaneseq
    %v106 = vshrl.u32 %v105, 7
    %v107 = vsub.s32 %v104, %v106
    %v108 = vrot.slane %v94, %v107
    %v109 = vcombine.high %v101, %v101
    %v110 = vcombine.high %v108, %v108
    %v112 = vcombine.low %v85, %v85
    %v114 = vunpack.c.l.s4 1966171168
    %v115 = vunpack.c.0.s8 %v114
    %v116 = vlaneseq
    %v117 = vshrl.u32 %v116, 7
    %v118 = vsub.s32 %v115, %v117
    %v119 = vrot.slane %v112, %v118
    %v120 = vcombine.high %v119, %v119
    %v122 = vunpack.c.l.s4 1966171168
    %v123 = vunpack.c.0.s8 %v122
    %v124 = vlaneseq
    %v125 = vshrl.u32 %v124, 7
    %v126 = vsub.s32 %v123, %v125
    %v127 = vrot.slane %v119, %v126
    %v129 = vunpack.c.l.s4 1966171168
    %v130 = vunpack.c.0.s8 %v129
    %v131 = vlaneseq
    %v132 = vshrl.u32 %v131, 7
    %v133 = vsub.s32 %v130, %v132
    %v134 = vrot.slane %v120, %v133
    %v135 = vcombine.high %v127, %v127
    %v136 = vcombine.high %v134, %v134
    %vm137 = vcmask 1040384
    %v140 = vsel %vm137, %v101, %v127
    %v144 = vsel %vm137, %v108, %v134
    %v148 = vsel %vm137, %v109, %v135
    %v152 = vsel %vm137, %v110, %v136
    %v154 = vld [vmem:[#allocation5] sm:$0xff]
    %v155 = vld [vmem:[#allocation5 + $0x8] sm:$0xf]
    %v156 = vld [vmem:[#allocation5 + $0xc] sm:$0xff]
    %v157 = vld [vmem:[#allocation5 + $0x14] sm:$0xf]
    %v158 = vld [vmem:[#allocation5 + $0x18] sm:$0xff]
    %v159 = vld [vmem:[#allocation5 + $0x20] sm:$0xf]
    %v160 = vld [vmem:[#allocation5 + $0x24] sm:$0xff]
    %v161 = vld [vmem:[#allocation5 + $0x2c] sm:$0xf]
    %v162 = vld [vmem:[#allocation5 + $0x30] sm:$0xff]
    %v163 = vld [vmem:[#allocation5 + $0x38] sm:$0xf]
    %v164 = vld [vmem:[#allocation5 + $0x3c] sm:$0xff]
    %v165 = vld [vmem:[#allocation5 + $0x44] sm:$0xf]
    %v166 = vld [vmem:[#allocation5 + $0x48] sm:$0xff]
    %v167 = vld [vmem:[#allocation5 + $0x50] sm:$0xf]
    %v168 = vld [vmem:[#allocation5 + $0x54] sm:$0xff]
    %v169 = vld [vmem:[#allocation5 + $0x5c] sm:$0xf]
    %v170 = vld [vmem:[#allocation5 + $0x60] sm:$0xff]
    %v171 = vld [vmem:[#allocation5 + $0x68] sm:$0xf]
    %v172 = vld [vmem:[#allocation5 + $0x6c] sm:$0xff]
    %v173 = vld [vmem:[#allocation5 + $0x74] sm:$0xf]
    %v174 = vld [vmem:[#allocation5 + $0x78] sm:$0xff]
    %v175 = vld [vmem:[#allocation5 + $0x80] sm:$0xf]
    %v176 = vld [vmem:[#allocation5 + $0x84] sm:$0xff]
    %v177 = vld [vmem:[#allocation5 + $0x8c] sm:$0xf]
    %v178 = vld [vmem:[#allocation5 + $0x90] sm:$0xff]
    %v179 = vld [vmem:[#allocation5 + $0x98] sm:$0xf]
    %v180 = vld [vmem:[#allocation5 + $0x9c] sm:$0xff]
    %v181 = vld [vmem:[#allocation5 + $0xa4] sm:$0xf]
    %v182 = vld [vmem:[#allocation5 + $0xa8] sm:$0xff]
    %v183 = vld [vmem:[#allocation5 + $0xb0] sm:$0xf]
    %v184 = vld [vmem:[#allocation5 + $0xb4] sm:$0xff]
    %v185 = vld [vmem:[#allocation5 + $0xbc] sm:$0xf]
    %v186 = vld [vmem:[#allocation5 + $0xc0] sm:$0xff]
    %v187 = vld [vmem:[#allocation5 + $0xc8] sm:$0xf]
    %v188 = vld [vmem:[#allocation5 + $0xcc] sm:$0xff]
    %v189 = vld [vmem:[#allocation5 + $0xd4] sm:$0xf]
    %v190 = vld [vmem:[#allocation5 + $0xd8] sm:$0xff]
    %v191 = vld [vmem:[#allocation5 + $0xe0] sm:$0xf]
    %v192 = vld [vmem:[#allocation5 + $0xe4] sm:$0xff]
    %v193 = vld [vmem:[#allocation5 + $0xec] sm:$0xf]
    %v194 = vld [vmem:[#allocation5 + $0xf0] sm:$0xff]
    %v195 = vld [vmem:[#allocation5 + $0xf8] sm:$0xf]
    %v196 = vld [vmem:[#allocation5 + $0xfc] sm:$0xff]
    %v197 = vld [vmem:[#allocation5 + $0x104] sm:$0xf]
    %v198 = vld [vmem:[#allocation5 + $0x108] sm:$0xff]
    %v199 = vld [vmem:[#allocation5 + $0x110] sm:$0xf]
    %v200 = vld [vmem:[#allocation5 + $0x114] sm:$0xff]
    %v201 = vld [vmem:[#allocation5 + $0x11c] sm:$0xf]
    %v202 = vld [vmem:[#allocation5 + $0x120] sm:$0xff]
    %v203 = vld [vmem:[#allocation5 + $0x128] sm:$0xf]
    %v204 = vld [vmem:[#allocation5 + $0x12c] sm:$0xff]
    %v205 = vld [vmem:[#allocation5 + $0x134] sm:$0xf]
    %v206 = vld [vmem:[#allocation5 + $0x138] sm:$0xff]
    %v207 = vld [vmem:[#allocation5 + $0x140] sm:$0xf]
    %v208 = vld [vmem:[#allocation5 + $0x144] sm:$0xff]
    %v209 = vld [vmem:[#allocation5 + $0x14c] sm:$0xf]
    %v210 = vld [vmem:[#allocation5 + $0x150] sm:$0xff]
    %v211 = vld [vmem:[#allocation5 + $0x158] sm:$0xf]
    %v212 = vld [vmem:[#allocation5 + $0x15c] sm:$0xff]
    %v213 = vld [vmem:[#allocation5 + $0x164] sm:$0xf]
    %v214 = vld [vmem:[#allocation5 + $0x168] sm:$0xff]
    %v215 = vld [vmem:[#allocation5 + $0x170] sm:$0xf]
    %v216 = vld [vmem:[#allocation5 + $0x174] sm:$0xff]
    %v217 = vld [vmem:[#allocation5 + $0x17c] sm:$0xf]
    %v218 = vld [vmem:[#allocation5 + $0x180] sm:$0xff]
    %v219 = vld [vmem:[#allocation5 + $0x188] sm:$0xf]
    %v220 = vld [vmem:[#allocation5 + $0x18c] sm:$0xff]
    %v221 = vld [vmem:[#allocation5 + $0x194] sm:$0xf]
    %v222 = vld [vmem:[#allocation5 + $0x198] sm:$0xff]
    %v223 = vld [vmem:[#allocation5 + $0x1a0] sm:$0xf]
    %v224 = vld [vmem:[#allocation5 + $0x1a4] sm:$0xff]
    %v225 = vld [vmem:[#allocation5 + $0x1ac] sm:$0xf]
    %v226 = vld [vmem:[#allocation5 + $0x1b0] sm:$0xff]
    %v227 = vld [vmem:[#allocation5 + $0x1b8] sm:$0xf]
    %v228 = vld [vmem:[#allocation5 + $0x1bc] sm:$0xff]
    %v229 = vld [vmem:[#allocation5 + $0x1c4] sm:$0xf]
    %v230 = vld [vmem:[#allocation5 + $0x1c8] sm:$0xff]
    %v231 = vld [vmem:[#allocation5 + $0x1d0] sm:$0xf]
    %v232 = vld [vmem:[#allocation5 + $0x1d4] sm:$0xff]
    %v233 = vld [vmem:[#allocation5 + $0x1dc] sm:$0xf]
    %v234 = vld [vmem:[#allocation5 + $0x1e0] sm:$0xff]
    %v235 = vld [vmem:[#allocation5 + $0x1e8] sm:$0xf]
    %v236 = vld [vmem:[#allocation5 + $0x1ec] sm:$0xff]
    %v237 = vld [vmem:[#allocation5 + $0x1f4] sm:$0xf]
    %v238 = vld [vmem:[#allocation5 + $0x1f8] sm:$0xff]
    %v239 = vld [vmem:[#allocation5 + $0x200] sm:$0xf]
    %v240 = vld [vmem:[#allocation5 + $0x204] sm:$0xff]
    %v241 = vld [vmem:[#allocation5 + $0x20c] sm:$0xf]
    %v242 = vld [vmem:[#allocation5 + $0x210] sm:$0xff]
    %v243 = vld [vmem:[#allocation5 + $0x218] sm:$0xf]
    %v244 = vld [vmem:[#allocation5 + $0x21c] sm:$0xff]
    %v245 = vld [vmem:[#allocation5 + $0x224] sm:$0xf]
    %v246 = vld [vmem:[#allocation5 + $0x228] sm:$0xff]
    %v247 = vld [vmem:[#allocation5 + $0x230] sm:$0xf]
    %v248 = vld [vmem:[#allocation5 + $0x234] sm:$0xff]
    %v249 = vld [vmem:[#allocation5 + $0x23c] sm:$0xf]
    %v250 = vld [vmem:[#allocation5 + $0x240] sm:$0xff]
    %v251 = vld [vmem:[#allocation5 + $0x248] sm:$0xf]
    %v252 = vld [vmem:[#allocation5 + $0x24c] sm:$0xff]
    %v253 = vld [vmem:[#allocation5 + $0x254] sm:$0xf]
    %v254 = vld [vmem:[#allocation5 + $0x258] sm:$0xff]
    %v255 = vld [vmem:[#allocation5 + $0x260] sm:$0xf]
    %v256 = vld [vmem:[#allocation5 + $0x264] sm:$0xff]
    %v257 = vld [vmem:[#allocation5 + $0x26c] sm:$0xf]
    %v258 = vld [vmem:[#allocation5 + $0x270] sm:$0xff]
    %v259 = vld [vmem:[#allocation5 + $0x278] sm:$0xf]
    %v260 = vld [vmem:[#allocation5 + $0x27c] sm:$0xff]
    %v261 = vld [vmem:[#allocation5 + $0x284] sm:$0xf]
    %v262 = vld [vmem:[#allocation5 + $0x288] sm:$0xff]
    %v263 = vld [vmem:[#allocation5 + $0x290] sm:$0xf]
    %v264 = vld [vmem:[#allocation5 + $0x294] sm:$0xff]
    %v265 = vld [vmem:[#allocation5 + $0x29c] sm:$0xf]
    %v266 = vld [vmem:[#allocation5 + $0x2a0] sm:$0xff]
    %v267 = vld [vmem:[#allocation5 + $0x2a8] sm:$0xf]
    %v268 = vld [vmem:[#allocation5 + $0x2ac] sm:$0xff]
    %v269 = vld [vmem:[#allocation5 + $0x2b4] sm:$0xf]
    %v270 = vld [vmem:[#allocation5 + $0x2b8] sm:$0xff]
    %v271 = vld [vmem:[#allocation5 + $0x2c0] sm:$0xf]
    %v272 = vld [vmem:[#allocation5 + $0x2c4] sm:$0xff]
    %v273 = vld [vmem:[#allocation5 + $0x2cc] sm:$0xf]
    %v274 = vld [vmem:[#allocation5 + $0x2d0] sm:$0xff]
    %v275 = vld [vmem:[#allocation5 + $0x2d8] sm:$0xf]
    %v276 = vld [vmem:[#allocation5 + $0x2dc] sm:$0xff]
    %v277 = vld [vmem:[#allocation5 + $0x2e4] sm:$0xf]
    %v278 = vld [vmem:[#allocation5 + $0x2e8] sm:$0xff]
    %v279 = vld [vmem:[#allocation5 + $0x2f0] sm:$0xf]
    %v280 = vld [vmem:[#allocation5 + $0x2f4] sm:$0xff]
    %v281 = vld [vmem:[#allocation5 + $0x2fc] sm:$0xf]
    %v282 = vld [vmem:[%s3] sm:$0x7]
    %v284 = vlaneseq
    %v285 = vshrl.u32 %v284, 7
    %v286 = vsub.s32 0, %v285
    %v287 = vrot.slane %v282, %v286
    %v288 = vlaneseq
    %v289 = vshrl.u32 %v288, 7
    %v290 = vsub.s32 1, %v289
    %v291 = vrot.slane %v282, %v290
    %v292 = vlaneseq
    %v293 = vshrl.u32 %v292, 7
    %v294 = vsub.s32 2, %v293
    %v295 = vrot.slane %v282, %v294
    %v427 = vunpack.c.l.b16 %v154
    %v428 = vunpack.c.h.b16 %v154
    %v429 = vunpack.c.l.b16 %v155
    %v430 = vunpack.c.l.b16 %v156
    %v431 = vunpack.c.h.b16 %v156
    %v432 = vunpack.c.l.b16 %v157
    %v433 = vunpack.c.l.b16 %v158
    %v434 = vunpack.c.h.b16 %v158
    %v435 = vunpack.c.l.b16 %v159
    %v436 = vunpack.c.l.b16 %v160
    %v437 = vunpack.c.h.b16 %v160
    %v438 = vunpack.c.l.b16 %v161
    %v439 = vunpack.c.l.b16 %v162
    %v440 = vunpack.c.h.b16 %v162
    %v441 = vunpack.c.l.b16 %v163
    %v442 = vunpack.c.l.b16 %v164
    %v443 = vunpack.c.h.b16 %v164
    %v444 = vunpack.c.l.b16 %v165
    %v445 = vunpack.c.l.b16 %v166
    %v446 = vunpack.c.h.b16 %v166
    %v447 = vunpack.c.l.b16 %v167
    %v448 = vunpack.c.l.b16 %v168
    %v449 = vunpack.c.h.b16 %v168
    %v450 = vunpack.c.l.b16 %v169
    %v451 = vunpack.c.l.b16 %v170
    %v452 = vunpack.c.h.b16 %v170
    %v453 = vunpack.c.l.b16 %v171
    %v454 = vunpack.c.l.b16 %v172
    %v455 = vunpack.c.h.b16 %v172
    %v456 = vunpack.c.l.b16 %v173
    %v457 = vunpack.c.l.b16 %v174
    %v458 = vunpack.c.h.b16 %v174
    %v459 = vunpack.c.l.b16 %v175
    %v460 = vunpack.c.l.b16 %v176
    %v461 = vunpack.c.h.b16 %v176
    %v462 = vunpack.c.l.b16 %v177
    %v463 = vunpack.c.l.b16 %v178
    %v464 = vunpack.c.h.b16 %v178
    %v465 = vunpack.c.l.b16 %v179
    %v466 = vunpack.c.l.b16 %v180
    %v467 = vunpack.c.h.b16 %v180
    %v468 = vunpack.c.l.b16 %v181
    %v469 = vunpack.c.l.b16 %v182
    %v470 = vunpack.c.h.b16 %v182
    %v471 = vunpack.c.l.b16 %v183
    %v472 = vunpack.c.l.b16 %v184
    %v473 = vunpack.c.h.b16 %v184
    %v474 = vunpack.c.l.b16 %v185
    %v475 = vunpack.c.l.b16 %v186
    %v476 = vunpack.c.h.b16 %v186
    %v477 = vunpack.c.l.b16 %v187
    %v478 = vunpack.c.l.b16 %v188
    %v479 = vunpack.c.h.b16 %v188
    %v480 = vunpack.c.l.b16 %v189
    %v481 = vunpack.c.l.b16 %v190
    %v482 = vunpack.c.h.b16 %v190
    %v483 = vunpack.c.l.b16 %v191
    %v484 = vunpack.c.l.b16 %v192
    %v485 = vunpack.c.h.b16 %v192
    %v486 = vunpack.c.l.b16 %v193
    %v487 = vunpack.c.l.b16 %v194
    %v488 = vunpack.c.h.b16 %v194
    %v489 = vunpack.c.l.b16 %v195
    %v490 = vunpack.c.l.b16 %v196
    %v491 = vunpack.c.h.b16 %v196
    %v492 = vunpack.c.l.b16 %v197
    %v493 = vunpack.c.l.b16 %v198
    %v494 = vunpack.c.h.b16 %v198
    %v495 = vunpack.c.l.b16 %v199
    %v496 = vunpack.c.l.b16 %v200
    %v497 = vunpack.c.h.b16 %v200
    %v498 = vunpack.c.l.b16 %v201
    %v499 = vunpack.c.l.b16 %v202
    %v500 = vunpack.c.h.b16 %v202
    %v501 = vunpack.c.l.b16 %v203
    %v502 = vunpack.c.l.b16 %v204
    %v503 = vunpack.c.h.b16 %v204
    %v504 = vunpack.c.l.b16 %v205
    %v505 = vunpack.c.l.b16 %v206
    %v506 = vunpack.c.h.b16 %v206
    %v507 = vunpack.c.l.b16 %v207
    %v508 = vunpack.c.l.b16 %v208
    %v509 = vunpack.c.h.b16 %v208
    %v510 = vunpack.c.l.b16 %v209
    %v511 = vunpack.c.l.b16 %v210
    %v512 = vunpack.c.h.b16 %v210
    %v513 = vunpack.c.l.b16 %v211
    %v514 = vunpack.c.l.b16 %v212
    %v515 = vunpack.c.h.b16 %v212
    %v516 = vunpack.c.l.b16 %v213
    %v517 = vunpack.c.l.b16 %v214
    %v518 = vunpack.c.h.b16 %v214
    %v519 = vunpack.c.l.b16 %v215
    %v520 = vunpack.c.l.b16 %v216
    %v521 = vunpack.c.h.b16 %v216
    %v522 = vunpack.c.l.b16 %v217
    %v523 = vunpack.c.l.b16 %v218
    %v524 = vunpack.c.h.b16 %v218
    %v525 = vunpack.c.l.b16 %v219
    %v526 = vunpack.c.l.b16 %v220
    %v527 = vunpack.c.h.b16 %v220
    %v528 = vunpack.c.l.b16 %v221
    %v529 = vunpack.c.l.b16 %v222
    %v530 = vunpack.c.h.b16 %v222
    %v531 = vunpack.c.l.b16 %v223
    %v532 = vunpack.c.l.b16 %v224
    %v533 = vunpack.c.h.b16 %v224
    %v534 = vunpack.c.l.b16 %v225
    %v535 = vunpack.c.l.b16 %v226
    %v536 = vunpack.c.h.b16 %v226
    %v537 = vunpack.c.l.b16 %v227
    %v538 = vunpack.c.l.b16 %v228
    %v539 = vunpack.c.h.b16 %v228
    %v540 = vunpack.c.l.b16 %v229
    %v541 = vunpack.c.l.b16 %v230
    %v542 = vunpack.c.h.b16 %v230
    %v543 = vunpack.c.l.b16 %v231
    %v544 = vunpack.c.l.b16 %v232
    %v545 = vunpack.c.h.b16 %v232
    %v546 = vunpack.c.l.b16 %v233
    %v547 = vunpack.c.l.b16 %v234
    %v548 = vunpack.c.h.b16 %v234
    %v549 = vunpack.c.l.b16 %v235
    %v550 = vunpack.c.l.b16 %v236
    %v551 = vunpack.c.h.b16 %v236
    %v552 = vunpack.c.l.b16 %v237
    %v553 = vunpack.c.l.b16 %v238
    %v554 = vunpack.c.h.b16 %v238
    %v555 = vunpack.c.l.b16 %v239
    %v556 = vunpack.c.l.b16 %v240
    %v557 = vunpack.c.h.b16 %v240
    %v558 = vunpack.c.l.b16 %v241
    %v559 = vunpack.c.l.b16 %v242
    %v560 = vunpack.c.h.b16 %v242
    %v561 = vunpack.c.l.b16 %v243
    %v562 = vunpack.c.l.b16 %v244
    %v563 = vunpack.c.h.b16 %v244
    %v564 = vunpack.c.l.b16 %v245
    %v565 = vunpack.c.l.b16 %v246
    %v566 = vunpack.c.h.b16 %v246
    %v567 = vunpack.c.l.b16 %v247
    %v568 = vunpack.c.l.b16 %v248
    %v569 = vunpack.c.h.b16 %v248
    %v570 = vunpack.c.l.b16 %v249
    %v571 = vunpack.c.l.b16 %v250
    %v572 = vunpack.c.h.b16 %v250
    %v573 = vunpack.c.l.b16 %v251
    %v574 = vunpack.c.l.b16 %v252
    %v575 = vunpack.c.h.b16 %v252
    %v576 = vunpack.c.l.b16 %v253
    %v577 = vunpack.c.l.b16 %v254
    %v578 = vunpack.c.h.b16 %v254
    %v579 = vunpack.c.l.b16 %v255
    %v580 = vunpack.c.l.b16 %v256
    %v581 = vunpack.c.h.b16 %v256
    %v582 = vunpack.c.l.b16 %v257
    %v583 = vunpack.c.l.b16 %v258
    %v584 = vunpack.c.h.b16 %v258
    %v585 = vunpack.c.l.b16 %v259
    %v586 = vunpack.c.l.b16 %v260
    %v587 = vunpack.c.h.b16 %v260
    %v588 = vunpack.c.l.b16 %v261
    %v589 = vunpack.c.l.b16 %v262
    %v590 = vunpack.c.h.b16 %v262
    %v591 = vunpack.c.l.b16 %v263
    %v592 = vunpack.c.l.b16 %v264
    %v593 = vunpack.c.h.b16 %v264
    %v594 = vunpack.c.l.b16 %v265
    %v595 = vunpack.c.l.b16 %v266
    %v596 = vunpack.c.h.b16 %v266
    %v597 = vunpack.c.l.b16 %v267
    %v598 = vunpack.c.l.b16 %v268
    %v599 = vunpack.c.h.b16 %v268
    %v600 = vunpack.c.l.b16 %v269
    %v601 = vunpack.c.l.b16 %v270
    %v602 = vunpack.c.h.b16 %v270
    %v603 = vunpack.c.l.b16 %v271
    %v604 = vunpack.c.l.b16 %v272
    %v605 = vunpack.c.h.b16 %v272
    %v606 = vunpack.c.l.b16 %v273
    %v607 = vunpack.c.l.b16 %v274
    %v608 = vunpack.c.h.b16 %v274
    %v609 = vunpack.c.l.b16 %v275
    %v610 = vunpack.c.l.b16 %v276
    %v611 = vunpack.c.h.b16 %v276
    %v612 = vunpack.c.l.b16 %v277
    %v613 = vunpack.c.l.b16 %v278
    %v614 = vunpack.c.h.b16 %v278
    %v615 = vunpack.c.l.b16 %v279
    %v616 = vunpack.c.l.b16 %v280
    %v617 = vunpack.c.h.b16 %v280
    %v618 = vunpack.c.l.b16 %v281
    %v619 = vpack.c.b16 %v430, %v427
    %v620 = vpack.c.b16 %v431, %v428
    %v621 = vpack.c.b16 %v432, %v429
    %v622 = vpack.c.b16 %v436, %v433
    %v623 = vpack.c.b16 %v437, %v434
    %v624 = vpack.c.b16 %v438, %v435
    %v625 = vpack.c.b16 %v442, %v439
    %v626 = vpack.c.b16 %v443, %v440
    %v627 = vpack.c.b16 %v444, %v441
    %v628 = vpack.c.b16 %v448, %v445
    %v629 = vpack.c.b16 %v449, %v446
    %v630 = vpack.c.b16 %v450, %v447
    %v631 = vpack.c.b16 %v454, %v451
    %v632 = vpack.c.b16 %v455, %v452
    %v633 = vpack.c.b16 %v456, %v453
    %v634 = vpack.c.b16 %v460, %v457
    %v635 = vpack.c.b16 %v461, %v458
    %v636 = vpack.c.b16 %v462, %v459
    %v637 = vpack.c.b16 %v466, %v463
    %v638 = vpack.c.b16 %v467, %v464
    %v639 = vpack.c.b16 %v468, %v465
    %v640 = vpack.c.b16 %v472, %v469
    %v641 = vpack.c.b16 %v473, %v470
    %v642 = vpack.c.b16 %v474, %v471
    %v643 = vpack.c.b16 %v478, %v475
    %v644 = vpack.c.b16 %v479, %v476
    %v645 = vpack.c.b16 %v480, %v477
    %v646 = vpack.c.b16 %v484, %v481
    %v647 = vpack.c.b16 %v485, %v482
    %v648 = vpack.c.b16 %v486, %v483
    %v649 = vpack.c.b16 %v490, %v487
    %v650 = vpack.c.b16 %v491, %v488
    %v651 = vpack.c.b16 %v492, %v489
    %v652 = vpack.c.b16 %v496, %v493
    %v653 = vpack.c.b16 %v497, %v494
    %v654 = vpack.c.b16 %v498, %v495
    %v655 = vpack.c.b16 %v502, %v499
    %v656 = vpack.c.b16 %v503, %v500
    %v657 = vpack.c.b16 %v504, %v501
    %v658 = vpack.c.b16 %v508, %v505
    %v659 = vpack.c.b16 %v509, %v506
    %v660 = vpack.c.b16 %v510, %v507
    %v661 = vpack.c.b16 %v514, %v511
    %v662 = vpack.c.b16 %v515, %v512
    %v663 = vpack.c.b16 %v516, %v513
    %v664 = vpack.c.b16 %v520, %v517
    %v665 = vpack.c.b16 %v521, %v518
    %v666 = vpack.c.b16 %v522, %v519
    %v667 = vpack.c.b16 %v526, %v523
    %v668 = vpack.c.b16 %v527, %v524
    %v669 = vpack.c.b16 %v528, %v525
    %v670 = vpack.c.b16 %v532, %v529
    %v671 = vpack.c.b16 %v533, %v530
    %v672 = vpack.c.b16 %v534, %v531
    %v673 = vpack.c.b16 %v538, %v535
    %v674 = vpack.c.b16 %v539, %v536
    %v675 = vpack.c.b16 %v540, %v537
    %v676 = vpack.c.b16 %v544, %v541
    %v677 = vpack.c.b16 %v545, %v542
    %v678 = vpack.c.b16 %v546, %v543
    %v679 = vpack.c.b16 %v550, %v547
    %v680 = vpack.c.b16 %v551, %v548
    %v681 = vpack.c.b16 %v552, %v549
    %v682 = vpack.c.b16 %v556, %v553
    %v683 = vpack.c.b16 %v557, %v554
    %v684 = vpack.c.b16 %v558, %v555
    %v685 = vpack.c.b16 %v562, %v559
    %v686 = vpack.c.b16 %v563, %v560
    %v687 = vpack.c.b16 %v564, %v561
    %v688 = vpack.c.b16 %v568, %v565
    %v689 = vpack.c.b16 %v569, %v566
    %v690 = vpack.c.b16 %v570, %v567
    %v691 = vpack.c.b16 %v574, %v571
    %v692 = vpack.c.b16 %v575, %v572
    %v693 = vpack.c.b16 %v576, %v573
    %v694 = vpack.c.b16 %v580, %v577
    %v695 = vpack.c.b16 %v581, %v578
    %v696 = vpack.c.b16 %v582, %v579
    %v697 = vpack.c.b16 %v586, %v583
    %v698 = vpack.c.b16 %v587, %v584
    %v699 = vpack.c.b16 %v588, %v585
    %v700 = vpack.c.b16 %v592, %v589
    %v701 = vpack.c.b16 %v593, %v590
    %v702 = vpack.c.b16 %v594, %v591
    %v703 = vpack.c.b16 %v598, %v595
    %v704 = vpack.c.b16 %v599, %v596
    %v705 = vpack.c.b16 %v600, %v597
    %v706 = vpack.c.b16 %v604, %v601
    %v707 = vpack.c.b16 %v605, %v602
    %v708 = vpack.c.b16 %v606, %v603
    %v709 = vpack.c.b16 %v610, %v607
    %v710 = vpack.c.b16 %v611, %v608
    %v711 = vpack.c.b16 %v612, %v609
    %v712 = vpack.c.b16 %v616, %v613
    %v713 = vpack.c.b16 %v617, %v614
    %v714 = vpack.c.b16 %v618, %v615
    %811 = vmatprep.subr.bf16.mxu0 %v620
    %812 = vmatpush1.bf16.msra.mxu0 %v619
    %813 = vmatprep.subr.bf16.mxu0 %v623
    %814 = vmatpush1.bf16.msra.mxu0 %v622
    %815 = vmatprep.subr.bf16.mxu0 %v626
    %816 = vmatpush1.bf16.msra.mxu0 %v625
    %817 = vmatprep.subr.bf16.mxu0 %v629
    %818 = vmatpush1.bf16.msra.mxu0 %v628
    %819 = vmatprep.subr.bf16.mxu0 %v632
    %820 = vmatpush1.bf16.msra.mxu0 %v631
    %821 = vmatprep.subr.bf16.mxu0 %v635
    %822 = vmatpush1.bf16.msra.mxu0 %v634
    %823 = vmatprep.subr.bf16.mxu0 %v638
    %824 = vmatpush1.bf16.msra.mxu0 %v637
    %825 = vmatprep.subr.bf16.mxu0 %v641
    %826 = vmatpush1.bf16.msra.mxu0 %v640
    %827 = vmatprep.subr.bf16.mxu0 %v644
    %828 = vmatpush1.bf16.msra.mxu0 %v643
    %829 = vmatprep.subr.bf16.mxu0 %v647
    %830 = vmatpush1.bf16.msra.mxu0 %v646
    %831 = vmatprep.subr.bf16.mxu0 %v650
    %832 = vmatpush1.bf16.msra.mxu0 %v649
    %833 = vmatprep.subr.bf16.mxu0 %v653
    %834 = vmatpush1.bf16.msra.mxu0 %v652
    %835 = vmatprep.subr.bf16.mxu0 %v656
    %836 = vmatpush1.bf16.msra.mxu0 %v655
    %837 = vmatprep.subr.bf16.mxu0 %v659
    %838 = vmatpush1.bf16.msra.mxu0 %v658
    %839 = vmatprep.subr.bf16.mxu0 %v662
    %840 = vmatpush1.bf16.msra.mxu0 %v661
    %841 = vmatprep.subr.bf16.mxu0 %v665
    %842 = vmatpush1.bf16.msra.mxu0 %v664
    %843 = vmatprep.mubr.bf16.mxu0 %v144
    %844 = vmatmul.mubr.bf16.gmra.mrb[0].mxu0 %v140
    %v845 = vpop.f32.mrb[0].mxu0
    %v846 = vadd.f32 %v287, %v845
    %v847 = vpop.f32.mrb[0].mxu0
    %v848 = vadd.f32 %v291, %v847
    %v849 = vpop.f32.mrb[0].mxu0
    %v850 = vpop.f32.mrb[0].mxu0
    %851 = vdwg.mxu0
    %852 = vmatprep.subr.bf16.mxu0 %v668
    %853 = vmatpush1.bf16.msra.mxu0 %v667
    %854 = vmatprep.subr.bf16.mxu0 %v671
    %855 = vmatpush1.bf16.msra.mxu0 %v670
    %856 = vmatprep.subr.bf16.mxu0 %v674
    %857 = vmatpush1.bf16.msra.mxu0 %v673
    %858 = vmatprep.subr.bf16.mxu0 %v677
    %859 = vmatpush1.bf16.msra.mxu0 %v676
    %860 = vmatprep.subr.bf16.mxu0 %v680
    %861 = vmatpush1.bf16.msra.mxu0 %v679
    %862 = vmatprep.subr.bf16.mxu0 %v683
    %863 = vmatpush1.bf16.msra.mxu0 %v682
    %864 = vmatprep.subr.bf16.mxu0 %v686
    %865 = vmatpush1.bf16.msra.mxu0 %v685
    %866 = vmatprep.subr.bf16.mxu0 %v689
    %867 = vmatpush1.bf16.msra.mxu0 %v688
    %868 = vmatprep.subr.bf16.mxu0 %v692
    %869 = vmatpush1.bf16.msra.mxu0 %v691
    %870 = vmatprep.subr.bf16.mxu0 %v695
    %871 = vmatpush1.bf16.msra.mxu0 %v694
    %872 = vmatprep.subr.bf16.mxu0 %v698
    %873 = vmatpush1.bf16.msra.mxu0 %v697
    %874 = vmatprep.subr.bf16.mxu0 %v701
    %875 = vmatpush1.bf16.msra.mxu0 %v700
    %876 = vmatprep.subr.bf16.mxu0 %v704
    %877 = vmatpush1.bf16.msra.mxu0 %v703
    %878 = vmatprep.subr.bf16.mxu0 %v707
    %879 = vmatpush1.bf16.msra.mxu0 %v706
    %880 = vmatprep.subr.bf16.mxu0 %v710
    %881 = vmatpush1.bf16.msra.mxu0 %v709
    %882 = vmatprep.subr.bf16.mxu0 %v713
    %883 = vmatpush1.bf16.msra.mxu0 %v712
    %884 = vmatprep.mubr.bf16.mxu0 %v152
    %885 = vmatmul.mubr.bf16.gmra.mrb[0].mxu0 %v148
    %v886 = vpop.f32.mrb[0].mxu0
    %v887 = vadd.f32 %v846, %v886
    %v888 = vpop.f32.mrb[0].mxu0
    %v889 = vadd.f32 %v848, %v888
    %v890 = vpop.f32.mrb[0].mxu0
    %v891 = vpop.f32.mrb[0].mxu0
    %892 = vdwg.mxu0
    %893 = vmatprep.subr.bf16.mxu0 0
    %894 = vmatpush1.bf16.msra.mxu0 %v621
    %895 = vmatprep.subr.bf16.mxu0 0
    %896 = vmatpush1.bf16.msra.mxu0 %v624
    %897 = vmatprep.subr.bf16.mxu0 0
    %898 = vmatpush1.bf16.msra.mxu0 %v627
    %899 = vmatprep.subr.bf16.mxu0 0
    %900 = vmatpush1.bf16.msra.mxu0 %v630
    %901 = vmatprep.subr.bf16.mxu0 0
    %902 = vmatpush1.bf16.msra.mxu0 %v633
    %903 = vmatprep.subr.bf16.mxu0 0
    %904 = vmatpush1.bf16.msra.mxu0 %v636
    %905 = vmatprep.subr.bf16.mxu0 0
    %906 = vmatpush1.bf16.msra.mxu0 %v639
    %907 = vmatprep.subr.bf16.mxu0 0
    %908 = vmatpush1.bf16.msra.mxu0 %v642
    %909 = vmatprep.subr.bf16.mxu0 0
    %910 = vmatpush1.bf16.msra.mxu0 %v645
    %911 = vmatprep.subr.bf16.mxu0 0
    %912 = vmatpush1.bf16.msra.mxu0 %v648
    %913 = vmatprep.subr.bf16.mxu0 0
    %914 = vmatpush1.bf16.msra.mxu0 %v651
    %915 = vmatprep.subr.bf16.mxu0 0
    %916 = vmatpush1.bf16.msra.mxu0 %v654
    %917 = vmatprep.subr.bf16.mxu0 0
    %918 = vmatpush1.bf16.msra.mxu0 %v657
    %919 = vmatprep.subr.bf16.mxu0 0
    %920 = vmatpush1.bf16.msra.mxu0 %v660
    %921 = vmatprep.subr.bf16.mxu0 0
    %922 = vmatpush1.bf16.msra.mxu0 %v663
    %923 = vmatprep.subr.bf16.mxu0 0
    %924 = vmatpush1.bf16.msra.mxu0 %v666
    %925 = vmatprep.mubr.bf16.mxu0 %v144
    %926 = vmatmul.mubr.bf16.gmra.mrb[0].mxu0 %v140
    %v927 = vpop.f32.mrb[0].mxu0
    %v928 = vadd.f32 %v295, %v927
    %v929 = vpop.f32.mrb[0].mxu0
    %v930 = vpop.f32.mrb[0].mxu0
    %v931 = vpop.f32.mrb[0].mxu0
    %932 = vdwg.mxu0
    %933 = vmatprep.subr.bf16.mxu0 0
    %934 = vmatpush1.bf16.msra.mxu0 %v669
    %935 = vmatprep.subr.bf16.mxu0 0
    %936 = vmatpush1.bf16.msra.mxu0 %v672
    %937 = vmatprep.subr.bf16.mxu0 0
    %938 = vmatpush1.bf16.msra.mxu0 %v675
    %939 = vmatprep.subr.bf16.mxu0 0
    %940 = vmatpush1.bf16.msra.mxu0 %v678
    %941 = vmatprep.subr.bf16.mxu0 0
    %942 = vmatpush1.bf16.msra.mxu0 %v681
    %943 = vmatprep.subr.bf16.mxu0 0
    %944 = vmatpush1.bf16.msra.mxu0 %v684
    %945 = vmatprep.subr.bf16.mxu0 0
    %946 = vmatpush1.bf16.msra.mxu0 %v687
    %947 = vmatprep.subr.bf16.mxu0 0
    %948 = vmatpush1.bf16.msra.mxu0 %v690
    %949 = vmatprep.subr.bf16.mxu0 0
    %950 = vmatpush1.bf16.msra.mxu0 %v693
    %951 = vmatprep.subr.bf16.mxu0 0
    %952 = vmatpush1.bf16.msra.mxu0 %v696
    %953 = vmatprep.subr.bf16.mxu0 0
    %954 = vmatpush1.bf16.msra.mxu0 %v699
    %955 = vmatprep.subr.bf16.mxu0 0
    %956 = vmatpush1.bf16.msra.mxu0 %v702
    %957 = vmatprep.subr.bf16.mxu0 0
    %958 = vmatpush1.bf16.msra.mxu0 %v705
    %959 = vmatprep.subr.bf16.mxu0 0
    %960 = vmatpush1.bf16.msra.mxu0 %v708
    %961 = vmatprep.subr.bf16.mxu0 0
    %962 = vmatpush1.bf16.msra.mxu0 %v711
    %963 = vmatprep.subr.bf16.mxu0 0
    %964 = vmatpush1.bf16.msra.mxu0 %v714
    %965 = vmatprep.mubr.bf16.mxu0 %v152
    %966 = vmatmul.mubr.bf16.gmra.mrb[0].mxu0 %v148
    %v967 = vpop.f32.mrb[0].mxu0
    %v968 = vadd.f32 %v928, %v967
    %v969 = vpop.f32.mrb[0].mxu0
    %v970 = vpop.f32.mrb[0].mxu0
    %v971 = vpop.f32.mrb[0].mxu0
    %972 = vdwg.mxu0
    %v973 = vmul.f32 %v887, %v889
    %vm974 = vcmask 254976
    %v975 = vsel %vm974, %v973, 0.0
    %976 = vadd.xlane.f32.xlu0 %v975
    %v977 = vpop.xlane.xlu0 %976
    %v979 = vrot.slane %v889, 2
    %v981 = vmul.f32 %v887, %v979
    %v982 = vsel %vm974, %v981, 0.0
    %983 = vadd.xlane.f32.xlu0 %v982
    %v984 = vpop.xlane.xlu0 %983
    %v985 = vmax.f32 %v977, %v984
    %v986 = vsub.f32 %v977, %v985
    %v987 = vmul.f32 %v986, 1.442695
    %v988 = vpow.pop %v987
    %v989 = vsub.f32 %v984, %v985
    %v990 = vmul.f32 %v989, 1.442695
    %v991 = vpow.pop %v990
    %v992 = vadd.f32 %v988, %v991
    %v993 = vmul.f32 %v988, %v968
    %v995 = vrot.slane %v968, 2
    %v997 = vmul.f32 %v991, %v995
    %v998 = vadd.f32 %v993, %v997
    %v999 = vrcp.pop %v992
    %v1000 = vmul.f32 1.0, %v999
    %v1001 = vmul.f32 %v998, %v1000
    %1003 = vrot.lane.b32.xlu0 %v973, 96
    %v1004 = vpop.permute.xlu0 %1003
    %v1006 = vsel %vm974, %v1004, 0.0
    %1007 = vadd.xlane.f32.xlu0 %v1006
    %v1008 = vpop.xlane.xlu0 %1007
    %1010 = vrot.lane.b32.xlu0 %v981, 96
    %v1011 = vpop.permute.xlu0 %1010
    %v1013 = vsel %vm974, %v1011, 0.0
    %1014 = vadd.xlane.f32.xlu0 %v1013
    %v1015 = vpop.xlane.xlu0 %1014
    %v1016 = vmax.f32 %v1008, %v1015
    %v1017 = vsub.f32 %v1008, %v1016
    %v1018 = vmul.f32 %v1017, 1.442695
    %v1019 = vpow.pop %v1018
    %v1020 = vsub.f32 %v1015, %v1016
    %v1021 = vmul.f32 %v1020, 1.442695
    %v1022 = vpow.pop %v1021
    %v1023 = vadd.f32 %v1019, %v1022
    %v1024 = vmul.f32 %v1019, %v968
    %1025 = vrot.lane.b32.xlu0 %v995, 96
    %v1026 = vpop.permute.xlu0 %1025
    %v1028 = vmul.f32 %v1022, %v1026
    %1030 = vrot.lane.b32.xlu0 %v1028, 32
    %v1031 = vpop.permute.xlu0 %1030
    %v1033 = vadd.f32 %v1024, %v1031
    %v1034 = vrcp.pop %v1023
    %v1035 = vmul.f32 1.0, %v1034
    %v1036 = vmul.f32 %v1033, %v1035
    %1037 = vrot.lane.b32.xlu0 %v973, 64
    %v1038 = vpop.permute.xlu0 %1037
    %v1040 = vsel %vm974, %v1038, 0.0
    %1041 = vadd.xlane.f32.xlu0 %v1040
    %v1042 = vpop.xlane.xlu0 %1041
    %1043 = vrot.lane.b32.xlu0 %v981, 64
    %v1044 = vpop.permute.xlu0 %1043
    %v1046 = vsel %vm974, %v1044, 0.0
    %1047 = vadd.xlane.f32.xlu0 %v1046
    %v1048 = vpop.xlane.xlu0 %1047
    %v1049 = vmax.f32 %v1042, %v1048
    %v1050 = vsub.f32 %v1042, %v1049
    %v1051 = vmul.f32 %v1050, 1.442695
    %v1052 = vpow.pop %v1051
    %v1053 = vsub.f32 %v1048, %v1049
    %v1054 = vmul.f32 %v1053, 1.442695
    %v1055 = vpow.pop %v1054
    %v1056 = vadd.f32 %v1052, %v1055
    %v1057 = vmul.f32 %v1052, %v968
    %1058 = vrot.lane.b32.xlu0 %v995, 64
    %v1059 = vpop.permute.xlu0 %1058
    %v1061 = vmul.f32 %v1055, %v1059
    %1063 = vrot.lane.b32.xlu0 %v1061, 64
    %v1064 = vpop.permute.xlu0 %1063
    %v1066 = vadd.f32 %v1057, %v1064
    %v1067 = vrcp.pop %v1056
    %v1068 = vmul.f32 1.0, %v1067
    %v1069 = vmul.f32 %v1066, %v1068
    %1070 = vrot.lane.b32.xlu0 %v973, 32
    %v1071 = vpop.permute.xlu0 %1070
    %v1073 = vsel %vm974, %v1071, 0.0
    %1074 = vadd.xlane.f32.xlu0 %v1073
    %v1075 = vpop.xlane.xlu0 %1074
    %1076 = vrot.lane.b32.xlu0 %v981, 32
    %v1077 = vpop.permute.xlu0 %1076
    %v1079 = vsel %vm974, %v1077, 0.0
    %1080 = vadd.xlane.f32.xlu0 %v1079
    %v1081 = vpop.xlane.xlu0 %1080
    %v1082 = vmax.f32 %v1075, %v1081
    %v1083 = vsub.f32 %v1075, %v1082
    %v1084 = vmul.f32 %v1083, 1.442695
    %v1085 = vpow.pop %v1084
    %v1086 = vsub.f32 %v1081, %v1082
    %v1087 = vmul.f32 %v1086, 1.442695
    %v1088 = vpow.pop %v1087
    %v1089 = vadd.f32 %v1085, %v1088
    %v1090 = vmul.f32 %v1085, %v968
    %1091 = vrot.lane.b32.xlu0 %v995, 32
    %v1092 = vpop.permute.xlu0 %1091
    %v1094 = vmul.f32 %v1088, %v1092
    %1096 = vrot.lane.b32.xlu0 %v1094, 96
    %v1097 = vpop.permute.xlu0 %1096
    %v1099 = vadd.f32 %v1090, %v1097
    %v1100 = vrcp.pop %v1089
    %v1101 = vmul.f32 1.0, %v1100
    %v1102 = vmul.f32 %v1099, %v1101
    %vm1103 = vcmask 261120
    %v1104 = vsel %vm1103, %v1001, %v1036
    %vm1105 = vcmask 523264
    %v1106 = vsel %vm1105, %v1104, %v1069
    %vm1107 = vcmask 785408
    %v1108 = vsel %vm1107, %v1106, %v1102
    %v1109 = vrot.slane %v889, 6
    %v1111 = vmul.f32 %v887, %v1109
    %vm1112 = vcmask 257026
    %v1113 = vsel %vm1112, %v1111, 0.0
    %1114 = vadd.xlane.f32.xlu0 %v1113
    %v1115 = vpop.xlane.xlu0 %1114
    %v1116 = vsel %vm1112, %v973, 0.0
    %1117 = vadd.xlane.f32.xlu0 %v1116
    %v1118 = vpop.xlane.xlu0 %1117
    %v1119 = vmax.f32 %v1115, %v1118
    %v1120 = vsub.f32 %v1115, %v1119
    %v1121 = vmul.f32 %v1120, 1.442695
    %v1122 = vpow.pop %v1121
    %v1123 = vsub.f32 %v1118, %v1119
    %v1124 = vmul.f32 %v1123, 1.442695
    %v1125 = vpow.pop %v1124
    %v1126 = vadd.f32 %v1122, %v1125
    %v1127 = vrot.slane %v968, 6
    %v1129 = vmul.f32 %v1122, %v1127
    %v1130 = vmul.f32 %v1125, %v968
    %v1131 = vadd.f32 %v1129, %v1130
    %v1132 = vrcp.pop %v1126
    %v1133 = vmul.f32 1.0, %v1132
    %v1134 = vmul.f32 %v1131, %v1133
    %1136 = vrot.lane.b32.xlu0 %v1111, 96
    %v1137 = vpop.permute.xlu0 %1136
    %v1139 = vsel %vm1112, %v1137, 0.0
    %1140 = vadd.xlane.f32.xlu0 %v1139
    %v1141 = vpop.xlane.xlu0 %1140
    %v1142 = vsel %vm1112, %v1004, 0.0
    %1143 = vadd.xlane.f32.xlu0 %v1142
    %v1144 = vpop.xlane.xlu0 %1143
    %v1145 = vmax.f32 %v1141, %v1144
    %v1146 = vsub.f32 %v1141, %v1145
    %v1147 = vmul.f32 %v1146, 1.442695
    %v1148 = vpow.pop %v1147
    %v1149 = vsub.f32 %v1144, %v1145
    %v1150 = vmul.f32 %v1149, 1.442695
    %v1151 = vpow.pop %v1150
    %v1152 = vadd.f32 %v1148, %v1151
    %1153 = vrot.lane.b32.xlu0 %v1127, 96
    %v1154 = vpop.permute.xlu0 %1153
    %v1156 = vmul.f32 %v1148, %v1154
    %v1157 = vmul.f32 %v1151, %v968
    %1159 = vrot.lane.b32.xlu0 %v1157, 96
    %v1160 = vpop.permute.xlu0 %1159
    %v1162 = vadd.f32 %v1156, %v1160
    %v1163 = vrcp.pop %v1152
    %v1164 = vmul.f32 1.0, %v1163
    %v1165 = vmul.f32 %v1162, %v1164
    %1166 = vrot.lane.b32.xlu0 %v1111, 64
    %v1167 = vpop.permute.xlu0 %1166
    %v1169 = vsel %vm1112, %v1167, 0.0
    %1170 = vadd.xlane.f32.xlu0 %v1169
    %v1171 = vpop.xlane.xlu0 %1170
    %v1172 = vsel %vm1112, %v1038, 0.0
    %1173 = vadd.xlane.f32.xlu0 %v1172
    %v1174 = vpop.xlane.xlu0 %1173
    %v1175 = vmax.f32 %v1171, %v1174
    %v1176 = vsub.f32 %v1171, %v1175
    %v1177 = vmul.f32 %v1176, 1.442695
    %v1178 = vpow.pop %v1177
    %v1179 = vsub.f32 %v1174, %v1175
    %v1180 = vmul.f32 %v1179, 1.442695
    %v1181 = vpow.pop %v1180
    %v1182 = vadd.f32 %v1178, %v1181
    %1183 = vrot.lane.b32.xlu0 %v1127, 64
    %v1184 = vpop.permute.xlu0 %1183
    %v1186 = vmul.f32 %v1178, %v1184
    %v1187 = vmul.f32 %v1181, %v968
    %1189 = vrot.lane.b32.xlu0 %v1187, 64
    %v1190 = vpop.permute.xlu0 %1189
    %v1192 = vadd.f32 %v1186, %v1190
    %v1193 = vrcp.pop %v1182
    %v1194 = vmul.f32 1.0, %v1193
    %v1195 = vmul.f32 %v1192, %v1194
    %1196 = vrot.lane.b32.xlu0 %v1111, 32
    %v1197 = vpop.permute.xlu0 %1196
    %v1199 = vsel %vm1112, %v1197, 0.0
    %1200 = vadd.xlane.f32.xlu0 %v1199
    %v1201 = vpop.xlane.xlu0 %1200
    %v1202 = vsel %vm1112, %v1071, 0.0
    %1203 = vadd.xlane.f32.xlu0 %v1202
    %v1204 = vpop.xlane.xlu0 %1203
    %v1205 = vmax.f32 %v1201, %v1204
    %v1206 = vsub.f32 %v1201, %v1205
    %v1207 = vmul.f32 %v1206, 1.442695
    %v1208 = vpow.pop %v1207
    %v1209 = vsub.f32 %v1204, %v1205
    %v1210 = vmul.f32 %v1209, 1.442695
    %v1211 = vpow.pop %v1210
    %v1212 = vadd.f32 %v1208, %v1211
    %1213 = vrot.lane.b32.xlu0 %v1127, 32
    %v1214 = vpop.permute.xlu0 %1213
    %v1216 = vmul.f32 %v1208, %v1214
    %v1217 = vmul.f32 %v1211, %v968
    %1219 = vrot.lane.b32.xlu0 %v1217, 32
    %v1220 = vpop.permute.xlu0 %1219
    %v1222 = vadd.f32 %v1216, %v1220
    %v1223 = vrcp.pop %v1212
    %v1224 = vmul.f32 1.0, %v1223
    %v1225 = vmul.f32 %v1222, %v1224
    %1227 = vrot.lane.b32.xlu0 %v1165, 32
    %v1228 = vpop.permute.xlu0 %1227
    %1231 = vrot.lane.b32.xlu0 %v1195, 64
    %v1232 = vpop.permute.xlu0 %1231
    %1235 = vrot.lane.b32.xlu0 %v1225, 96
    %v1236 = vpop.permute.xlu0 %1235
    %v1238 = vsel %vm1103, %v1134, %v1228
    %v1239 = vsel %vm1105, %v1238, %v1232
    %v1240 = vsel %vm1107, %v1239, %v1236
    %vm1241 = vcmask 1041408
    %v1242 = vsel %vm1241, %v1108, %v1240
    %v1243 = vpack.c.bf16 %v1242, %v1242
    %v1244 = vld [vmem:[#allocation7] sm:$0xf]
    %v1245 = vld [vmem:[#allocation7 + $0x4] sm:$0xf]
    %v1246 = vld [vmem:[#allocation7 + $0x8] sm:$0xf]
    %v1247 = vld [vmem:[#allocation7 + $0xc] sm:$0xf]
    %v1248 = vld [vmem:[#allocation7 + $0x10] sm:$0xf]
    %v1249 = vld [vmem:[#allocation7 + $0x14] sm:$0xf]
    %v1250 = vld [vmem:[#allocation7 + $0x18] sm:$0xf]
    %v1251 = vld [vmem:[#allocation7 + $0x1c] sm:$0xf]
    %v1252 = vld [vmem:[#allocation7 + $0x20] sm:$0xf]
    %v1253 = vld [vmem:[#allocation7 + $0x24] sm:$0xf]
    %v1254 = vld [vmem:[#allocation7 + $0x28] sm:$0xf]
    %v1255 = vld [vmem:[#allocation7 + $0x2c] sm:$0xf]
    %v1256 = vld [vmem:[#allocation7 + $0x30] sm:$0xf]
    %v1257 = vld [vmem:[#allocation7 + $0x34] sm:$0xf]
    %v1258 = vld [vmem:[#allocation7 + $0x38] sm:$0xf]
    %v1259 = vld [vmem:[#allocation7 + $0x3c] sm:$0xf]
    %v1276 = vunpack.c.l.b16 %v1244
    %v1277 = vunpack.c.l.b16 %v1245
    %v1278 = vunpack.c.l.b16 %v1246
    %v1279 = vunpack.c.l.b16 %v1247
    %v1280 = vunpack.c.l.b16 %v1248
    %v1281 = vunpack.c.l.b16 %v1249
    %v1282 = vunpack.c.l.b16 %v1250
    %v1283 = vunpack.c.l.b16 %v1251
    %v1284 = vunpack.c.l.b16 %v1252
    %v1285 = vunpack.c.l.b16 %v1253
    %v1286 = vunpack.c.l.b16 %v1254
    %v1287 = vunpack.c.l.b16 %v1255
    %v1288 = vunpack.c.l.b16 %v1256
    %v1289 = vunpack.c.l.b16 %v1257
    %v1290 = vunpack.c.l.b16 %v1258
    %v1291 = vunpack.c.l.b16 %v1259
    %v1292 = vpack.c.b16 %v1277, %v1276
    %v1293 = vpack.c.b16 %v1279, %v1278
    %v1294 = vpack.c.b16 %v1281, %v1280
    %v1295 = vpack.c.b16 %v1283, %v1282
    %v1296 = vpack.c.b16 %v1285, %v1284
    %v1297 = vpack.c.b16 %v1287, %v1286
    %v1298 = vpack.c.b16 %v1289, %v1288
    %v1299 = vpack.c.b16 %v1291, %v1290
    %1308 = vmatprep.subr.bf16.mxu0 0
    %1309 = vmatpush1.bf16.msra.mxu0 %v1292
    %1310 = vmatprep.subr.bf16.mxu0 0
    %1311 = vmatpush1.bf16.msra.mxu0 %v1293
    %1312 = vmatprep.subr.bf16.mxu0 0
    %1313 = vmatpush1.bf16.msra.mxu0 %v1294
    %1314 = vmatprep.subr.bf16.mxu0 0
    %1315 = vmatpush1.bf16.msra.mxu0 %v1295
    %1316 = vmatprep.subr.bf16.mxu0 0
    %1317 = vmatpush1.bf16.msra.mxu0 %v1296
    %1318 = vmatprep.subr.bf16.mxu0 0
    %1319 = vmatpush1.bf16.msra.mxu0 %v1297
    %1320 = vmatprep.subr.bf16.mxu0 0
    %1321 = vmatpush1.bf16.msra.mxu0 %v1298
    %1322 = vmatprep.subr.bf16.mxu0 0
    %1323 = vmatpush1.bf16.msra.mxu0 %v1299
    %1324 = vmatprep.subr.bf16.mxu0 0
    %1325 = vmatpush1.bf16.msra.mxu0 0
    %1326 = vmatprep.subr.bf16.mxu0 0
    %1327 = vmatpush1.bf16.msra.mxu0 0
    %1328 = vmatprep.subr.bf16.mxu0 0
    %1329 = vmatpush1.bf16.msra.mxu0 0
    %1330 = vmatprep.subr.bf16.mxu0 0
    %1331 = vmatpush1.bf16.msra.mxu0 0
    %1332 = vmatprep.subr.bf16.mxu0 0
    %1333 = vmatpush1.bf16.msra.mxu0 0
    %1334 = vmatprep.subr.bf16.mxu0 0
    %1335 = vmatpush1.bf16.msra.mxu0 0
    %1336 = vmatprep.subr.bf16.mxu0 0
    %1337 = vmatpush1.bf16.msra.mxu0 0
    %1338 = vmatprep.subr.bf16.mxu0 0
    %1339 = vmatpush1.bf16.msra.mxu0 0
    %1340 = vmatprep.mubr.bf16.mxu0 0
    %1341 = vmatmul.mubr.bf16.gmra.mrb[0].mxu0 %v1243
    %v1342 = vpop.f32.mrb[0].mxu0
    %v1343 = vadd.f32 0.0, %v1342
    %v1344 = vpop.f32.mrb[0].mxu0
    %v1345 = vpop.f32.mrb[0].mxu0
    %v1346 = vpop.f32.mrb[0].mxu0
    %1347 = vdwg.mxu0
    %v1348 = vld [vmem:[%s1] sm:$0x1]
    %v1349 = vld [vmem:[#allocation8] sm:$0xf]
    %v1350 = vld [vmem:[#allocation8 + $0x4] sm:$0xf]
    %v1351 = vld [vmem:[#allocation8 + $0x8] sm:$0xf]
    %v1352 = vld [vmem:[#allocation8 + $0xc] sm:$0xf]
    %v1353 = vld [vmem:[#allocation8 + $0x10] sm:$0xf]
    %v1354 = vld [vmem:[#allocation8 + $0x14] sm:$0xf]
    %v1355 = vld [vmem:[#allocation8 + $0x18] sm:$0xf]
    %v1356 = vld [vmem:[#allocation8 + $0x1c] sm:$0xf]
    %v1357 = vld [vmem:[#allocation8 + $0x20] sm:$0xf]
    %v1358 = vld [vmem:[#allocation8 + $0x24] sm:$0xf]
    %v1359 = vld [vmem:[#allocation8 + $0x28] sm:$0xf]
    %v1360 = vld [vmem:[#allocation8 + $0x2c] sm:$0xf]
    %v1361 = vld [vmem:[#allocation8 + $0x30] sm:$0xf]
    %v1362 = vld [vmem:[#allocation8 + $0x34] sm:$0xf]
    %v1363 = vld [vmem:[#allocation8 + $0x38] sm:$0xf]
    %v1364 = vld [vmem:[#allocation8 + $0x3c] sm:$0xf]
    %v1381 = vunpack.c.l.b16 %v1349
    %v1382 = vunpack.c.l.b16 %v1350
    %v1383 = vunpack.c.l.b16 %v1351
    %v1384 = vunpack.c.l.b16 %v1352
    %v1385 = vunpack.c.l.b16 %v1353
    %v1386 = vunpack.c.l.b16 %v1354
    %v1387 = vunpack.c.l.b16 %v1355
    %v1388 = vunpack.c.l.b16 %v1356
    %v1389 = vunpack.c.l.b16 %v1357
    %v1390 = vunpack.c.l.b16 %v1358
    %v1391 = vunpack.c.l.b16 %v1359
    %v1392 = vunpack.c.l.b16 %v1360
    %v1393 = vunpack.c.l.b16 %v1361
    %v1394 = vunpack.c.l.b16 %v1362
    %v1395 = vunpack.c.l.b16 %v1363
    %v1396 = vunpack.c.l.b16 %v1364
    %v1397 = vpack.c.b16 %v1382, %v1381
    %v1398 = vpack.c.b16 %v1384, %v1383
    %v1399 = vpack.c.b16 %v1386, %v1385
    %v1400 = vpack.c.b16 %v1388, %v1387
    %v1401 = vpack.c.b16 %v1390, %v1389
    %v1402 = vpack.c.b16 %v1392, %v1391
    %v1403 = vpack.c.b16 %v1394, %v1393
    %v1404 = vpack.c.b16 %v1396, %v1395
    %1413 = vmatprep.subr.bf16.mxu0 0
    %1414 = vmatpush1.bf16.msra.mxu0 %v1397
    %1415 = vmatprep.subr.bf16.mxu0 0
    %1416 = vmatpush1.bf16.msra.mxu0 %v1398
    %1417 = vmatprep.subr.bf16.mxu0 0
    %1418 = vmatpush1.bf16.msra.mxu0 %v1399
    %1419 = vmatprep.subr.bf16.mxu0 0
    %1420 = vmatpush1.bf16.msra.mxu0 %v1400
    %1421 = vmatprep.subr.bf16.mxu0 0
    %1422 = vmatpush1.bf16.msra.mxu0 %v1401
    %1423 = vmatprep.subr.bf16.mxu0 0
    %1424 = vmatpush1.bf16.msra.mxu0 %v1402
    %1425 = vmatprep.subr.bf16.mxu0 0
    %1426 = vmatpush1.bf16.msra.mxu0 %v1403
    %1427 = vmatprep.subr.bf16.mxu0 0
    %1428 = vmatpush1.bf16.msra.mxu0 %v1404
    %1429 = vmatprep.subr.bf16.mxu0 0
    %1430 = vmatpush1.bf16.msra.mxu0 0
    %1431 = vmatprep.subr.bf16.mxu0 0
    %1432 = vmatpush1.bf16.msra.mxu0 0
    %1433 = vmatprep.subr.bf16.mxu0 0
    %1434 = vmatpush1.bf16.msra.mxu0 0
    %1435 = vmatprep.subr.bf16.mxu0 0
    %1436 = vmatpush1.bf16.msra.mxu0 0
    %1437 = vmatprep.subr.bf16.mxu0 0
    %1438 = vmatpush1.bf16.msra.mxu0 0
    %1439 = vmatprep.subr.bf16.mxu0 0
    %1440 = vmatpush1.bf16.msra.mxu0 0
    %1441 = vmatprep.subr.bf16.mxu0 0
    %1442 = vmatpush1.bf16.msra.mxu0 0
    %1443 = vmatprep.subr.bf16.mxu0 0
    %1444 = vmatpush1.bf16.msra.mxu0 0
    %1445 = vmatprep.mubr.bf16.mxu0 0
    %1446 = vmatmul.mubr.bf16.gmra.mrb[0].mxu0 %v1348
    %v1447 = vpop.f32.mrb[0].mxu0
    %v1448 = vadd.f32 0.0, %v1447
    %v1449 = vpop.f32.mrb[0].mxu0
    %v1450 = vpop.f32.mrb[0].mxu0
    %v1451 = vpop.f32.mrb[0].mxu0
    %1452 = vdwg.mxu0
    %v1453 = vld [vmem:[%s6] sm:$0x1]
    %v1454 = vadd.f32 %v1343, %v1448
    %v1456 = vlaneseq
    %v1457 = vshrl.u32 %v1456, 7
    %v1458 = vsub.s32 0, %v1457
    %v1459 = vrot.slane %v1453, %v1458
    %v1461 = vadd.f32 %v1454, %v1459
    %1462 = vst [vmem:[#allocation10] sm:$0x3] %v1461
    %v1464 = vrot.slane %v1448, 6
    %v1466 = vadd.f32 %v1343, %v1464
    %v1467 = vadd.f32 %v1466, %v1459
    %s1468 = scalar_lea.vmem [#allocation10], 2
    %1469 = vst [vmem:[%s1468 - $0x2] sm:$0xc] %v1467
    // Predicated region
    $region46: #{tpu_custom_call.1} parent=1 // pred_check
      _
    $region47: #{tpu_custom_call.1} parent=1 // pred_check_branch
      %1471 = sbr.rel (0) target = $region49
    $region48: #{tpu_custom_call.1} parent=1 // pred_region
      %s1473 = ssub.s32 64, 64
      %1474 = vsyncadd [#allocation4], %s1473
      %s1475 = sshll.u32 [#allocation10], 4
      %s1476 = int_to_ptr.vmem [resolvable:$true] %s1475
      %1481 = dma.vmem_to_hbm [thread:$0]  %s1476, 64, %s7, [#allocation4], 32, 32, 2
    $region49: #{tpu_custom_call.1} parent=1 // pred_fallthru
      _
    // Predicated region
    $region50: #{tpu_custom_call.1} parent=1 // pred_check
      _
    $region51: #{tpu_custom_call.1} parent=1 // pred_check_branch
      %1483 = sbr.rel (0) target = $region53
    $region52: #{tpu_custom_call.1} parent=1 // pred_region
      %1484 = dma.done [#allocation4], 64
    $region53: #{tpu_custom_call.1} parent=1 // pred_fallthru
      _
    %1485 = vsyncpa [#allocation3], 1
    %1486 = vsyncpa [#allocation6], 1
    %1487 = vsyncpa [#allocation9], 1
    %1488 = vsyncpa [#allocation4], 1

</llo_original>
